<compile_context>
chip_gen: v6e
topology: v6e:2x2x1
jax: 0.10.0
libtpu: 0.0.40
codegen_flags: <defaults>
</compile_context>

<pallas_src>
import functools

import jax
import jax.numpy as jnp
import numpy as np
from jax.experimental import pallas as pl
from jax.experimental.pallas import tpu as pltpu

HIDDEN = 28
ENC_IN = 7
DEC_IN = 6
OUT_DIM = 6

# Padded sizes for lane-dense MXU / VPU work.
H_PAD = 32            # hidden padded so 4*H_PAD == 128 lanes exactly
IN_PAD = 8            # input feature dim padded (7 / 6 -> 8)
OUT_PAD = 128         # head output padded to a full lane width (sliced to 6 outside)
GATES = 4
_PACK_ORDER = (0, 1, 3, 2)   # packed gate layout (i, f, o, g) from PyTorch's (i, f, g, o)

# Row offsets inside the single (136, 128) parameter slab (all multiples of 8 -> tile aligned).
_R_ENC_WIH = 0      # (IN_PAD, 128)
_R_DEC_WIH = 8      # (IN_PAD, 128)
_R_ENC_WHH = 16     # (H_PAD, 128)
_R_DEC_WHH = 48     # (H_PAD, 128)
_R_ENC_B = 80       # row 80 holds the bias (block padded to 8 rows)
_R_DEC_B = 88
_R_OUT_W = 96       # (H_PAD, 128)
_R_OUT_B = 128      # row 128 holds the head bias
_SLAB_ROWS = 136


# ----------------------------------------------------------------------------
# Single fused kernel: encoder LSTM -> decoder LSTM -> ReLU + Linear head.
# All refs are whole-array VMEM blocks (grid=()); time loops are unrolled.
# ----------------------------------------------------------------------------
def _fused_kernel(enc_x_ref, dec_x_ref, p_ref, state_ref, out_ref, *, b_pad):
    H = H_PAD
    T_enc = enc_x_ref.shape[0] // b_pad
    T_dec = dec_x_ref.shape[0] // b_pad

    # Static, tile-aligned views into the packed parameter slab.
    enc_w_ih = p_ref[_R_ENC_WIH:_R_ENC_WIH + IN_PAD, :]
    dec_w_ih = p_ref[_R_DEC_WIH:_R_DEC_WIH + IN_PAD, :]
    enc_w_hh = p_ref[_R_ENC_WHH:_R_ENC_WHH + H_PAD, :]
    dec_w_hh = p_ref[_R_DEC_WHH:_R_DEC_WHH + H_PAD, :]
    enc_b = p_ref[_R_ENC_B:_R_ENC_B + 1, :]
    dec_b = p_ref[_R_DEC_B:_R_DEC_B + 1, :]
    out_w = p_ref[_R_OUT_W:_R_OUT_W + H_PAD, :]
    out_b = p_ref[_R_OUT_B:_R_OUT_B + 1, :]

    h = state_ref[0:b_pad, :]
    c = state_ref[b_pad:2 * b_pad, :]

    # ---- Hoisted input projections (+ folded biases): one MXU dot per LSTM, off the
    # serial recurrence chain.  Shapes: (T*B_PAD, 128).
    z_x_enc = jnp.dot(enc_x_ref[...], enc_w_ih, preferred_element_type=jnp.float32) + enc_b
    z_x_dec = jnp.dot(dec_x_ref[...], dec_w_ih, preferred_element_type=jnp.float32) + dec_b

    def step(z_x_t, h, c, w_hh):
        # Only the recurrent dot sits on the critical path now.
        z = z_x_t + jnp.dot(h, w_hh, preferred_element_type=jnp.float32)
        s = jax.nn.sigmoid(z[:, :3 * H])      # fused i, f, o
        g = jnp.tanh(z[:, 3 * H:])            # g
        i_g = s[:, :H]
        f_g = s[:, H:2 * H]
        o_g = s[:, 2 * H:]
        c_new = f_g * c + i_g * g
        h_new = o_g * jnp.tanh(c_new)
        return h_new, c_new

    # ---- Encoder: only the final (h, c) is kept.  Static unroll (tiny T). ----
    for t in range(T_enc):
        h, c = step(z_x_enc[t * b_pad:(t + 1) * b_pad, :], h, c, enc_w_hh)

    # ---- Decoder: collect every h_t, defer the head. ----
    hs = []
    for t in range(T_dec):
        h, c = step(z_x_dec[t * b_pad:(t + 1) * b_pad, :], h, c, dec_w_hh)
        hs.append(h)

    # ReLU + Linear head: one matmul, one dense (sublane+lane full) store.
    h_all = jnp.concatenate(hs, axis=0)                      # (T_dec*B_PAD, H_PAD)
    y = jnp.maximum(h_all, 0.0)
    out_ref[...] = jnp.dot(y, out_w, preferred_element_type=jnp.float32) + out_b


# ----------------------------------------------------------------------------
# Parameter construction (deterministic, PyTorch-style uniform(-1/sqrt(H), 1/sqrt(H)))
# in the "raw" per-gate layout (used by the pure-JAX reference).
# ----------------------------------------------------------------------------
def init_lstm_params(key, in_dim, hidden):
    k = 1.0 / np.sqrt(hidden)
    k1, k2, k3, k4 = jax.random.split(key, 4)
    # Gate order (i, f, g, o), stored transposed per-gate as (4, I, H) / (4, H, H).
    w_ih = jax.random.uniform(k1, (4, in_dim, hidden), jnp.float32, -k, k)
    w_hh = jax.random.uniform(k2, (4, hidden, hidden), jnp.float32, -k, k)
    b_ih = jax.random.uniform(k3, (4, 1, hidden), jnp.float32, -k, k)
    b_hh = jax.random.uniform(k4, (4, 1, hidden), jnp.float32, -k, k)
    return w_ih, w_hh, b_ih + b_hh


def init_linear_params(key, in_dim, out_dim):
    k = 1.0 / np.sqrt(in_dim)
    k1, k2 = jax.random.split(key)
    w = jax.random.uniform(k1, (in_dim, out_dim), jnp.float32, -k, k)
    b = jax.random.uniform(k2, (1, out_dim), jnp.float32, -k, k)
    return w, b


# ----------------------------------------------------------------------------
# Pack ALL parameters into one (136, 128) f32 slab (lane-dense, tile-aligned rows).
# Padded rows/columns are zero, so padded hidden lanes stay exactly 0 and never
# influence the real 28 hidden units or the 6 real outputs.
# ----------------------------------------------------------------------------
def pack_params(enc_wih, enc_whh, enc_b, dec_wih, dec_whh, dec_b, out_w, out_b):
    slab = np.zeros((_SLAB_ROWS, 128), np.float32)

    def place_lstm(w_ih, w_hh, b, row_ih, row_hh, row_b):
        in_dim, hidden = w_ih.shape[1], w_ih.shape[2]
        for slot, gate in enumerate(_PACK_ORDER):
            cols = slice(slot * H_PAD, slot * H_PAD + hidden)
            slab[row_ih:row_ih + in_dim, cols] = np.asarray(w_ih[gate])
            slab[row_hh:row_hh + hidden, cols] = np.asarray(w_hh[gate])
            slab[row_b, cols] = np.asarray(b[gate]).reshape(-1)

    place_lstm(enc_wih, enc_whh, enc_b, _R_ENC_WIH, _R_ENC_WHH, _R_ENC_B)
    place_lstm(dec_wih, dec_whh, dec_b, _R_DEC_WIH, _R_DEC_WHH, _R_DEC_B)
    slab[_R_OUT_W:_R_OUT_W + HIDDEN, :OUT_DIM] = np.asarray(out_w)
    slab[_R_OUT_B, :OUT_DIM] = np.asarray(out_b).reshape(-1)
    return jnp.asarray(slab)


def _pad_to(x, rows, cols):
    return jnp.pad(x, ((0, rows - x.shape[0]), (0, cols - x.shape[1])))


# ----------------------------------------------------------------------------
# Full model forward: one fused pallas_call (grid=()), 4 VMEM inputs, 1 dense output.
# ----------------------------------------------------------------------------
@jax.jit
def maize_lstm_forward(param_slab, inputs, inputs_, h0, c0):
    B, T_enc, _ = inputs.shape
    T_dec = inputs_.shape[1]
    B_PAD = ((B + 7) // 8) * 8   # full sublane group

    # (B, T, F) -> (T, B, F) -> pad -> flatten to (T*B_PAD, IN_PAD): time-major so the
    # per-step slice z_x[t*B_PAD:(t+1)*B_PAD] is a contiguous, tile-aligned slab.
    def prep(x, feat):
        x = jnp.transpose(x, (1, 0, 2))
        x = jnp.pad(x, ((0, 0), (0, B_PAD - B), (0, IN_PAD - feat)))
        return x.reshape(x.shape[0] * B_PAD, IN_PAD)

    enc_x = prep(inputs, ENC_IN)
    dec_x = prep(inputs_, DEC_IN)

    # h0 / c0 stacked into one (2*B_PAD, H_PAD) slab; pad rows/lanes are zero.
    state = jnp.concatenate(
        [_pad_to(h0, B_PAD, H_PAD), _pad_to(c0, B_PAD, H_PAD)], axis=0)

    vmem = pl.BlockSpec(memory_space=pltpu.MemorySpace.VMEM)
    out_flat = pl.pallas_call(
        functools.partial(_fused_kernel, b_pad=B_PAD),
        out_shape=jax.ShapeDtypeStruct((T_dec * B_PAD, OUT_PAD), jnp.float32),
        in_specs=[vmem] * 4,
        out_specs=vmem,
    )(enc_x, dec_x, param_slab, state)

    out = out_flat.reshape(T_dec, B_PAD, OUT_PAD)[:, :B, :OUT_DIM]
    return jnp.transpose(out, (1, 0, 2))     # (B, T_dec, OUT_DIM)


# ----------------------------------------------------------------------------
# Pure-JAX reference (unpadded, per-gate weights) for correctness check.
# ----------------------------------------------------------------------------
def _lstm_ref(x, w_ih, w_hh, b, h0, c0):
    def step(carry, x_t):
        h, c = carry
        zi = x_t @ w_ih[0] + h @ w_hh[0] + b[0]
        zf = x_t @ w_ih[1] + h @ w_hh[1] + b[1]
        zg = x_t @ w_ih[2] + h @ w_hh[2] + b[2]
        zo = x_t @ w_ih[3] + h @ w_hh[3] + b[3]
        i = jax.nn.sigmoid(zi); f = jax.nn.sigmoid(zf)
        g = jnp.tanh(zg); o = jax.nn.sigmoid(zo)
        c_new = f * c + i * g
        h_new = o * jnp.tanh(c_new)
        return (h_new, c_new), h_new

    (hT, cT), ys = jax.lax.scan(step, (h0, c0), jnp.swapaxes(x, 0, 1))
    return jnp.swapaxes(ys, 0, 1), hT, cT


def _forward_ref(raw_params, inputs, inputs_, h0, c0):
    (enc_wih, enc_whh, enc_b, dec_wih, dec_whh, dec_b, out_w, out_b) = raw_params
    _, h1, c1 = _lstm_ref(inputs, enc_wih, enc_whh, enc_b, h0, c0)
    dec_y, _, _ = _lstm_ref(inputs_, dec_wih, dec_whh, dec_b, h1, c1)
    return jnp.maximum(dec_y, 0.0) @ out_w + out_b


if __name__ == "__main__":
    key = jax.random.PRNGKey(0)
    k_enc, k_dec, k_out, k_x, k_xd, k_h0, k_c0 = jax.random.split(key, 7)

    # Small shapes consistent with the module: encoder feature=7, decoder feature=6.
    B, T_ENC, T_DEC = 2, 8, 5
    inputs = jax.random.normal(k_x, (B, T_ENC, ENC_IN), jnp.float32)
    inputs_ = jax.random.normal(k_xd, (B, T_DEC, DEC_IN), jnp.float32)

    # torch.randn(1, B, 28) initial states -> deterministic here, squeezed to (B, H).
    # TODO(synk): PyTorch draws fresh random h0/c0 each forward; here they are explicit inputs.
    h0 = jax.random.normal(k_h0, (B, HIDDEN), jnp.float32)
    c0 = jax.random.normal(k_c0, (B, HIDDEN), jnp.float32)

    # Raw (reference) parameters.
    enc_wih, enc_whh, enc_b = init_lstm_params(k_enc, ENC_IN, HIDDEN)
    dec_wih, dec_whh, dec_b = init_lstm_params(k_dec, DEC_IN, HIDDEN)
    out_w, out_b = init_linear_params(k_out, HIDDEN, OUT_DIM)
    raw_params = (enc_wih, enc_whh, enc_b, dec_wih, dec_whh, dec_b, out_w, out_b)

    # Single packed / padded parameter slab for the fused kernel.
    param_slab = pack_params(*raw_params)

    out = maize_lstm_forward(param_slab, inputs, inputs_, h0, c0)
    out = jax.block_until_ready(out)
    assert out.shape == (B, T_DEC, OUT_DIM), out.shape

    ref = jax.block_until_ready(_forward_ref(raw_params, inputs, inputs_, h0, c0))
    np.testing.assert_allclose(np.asarray(out), np.asarray(ref),
                               atol=2e-3, rtol=2e-3)

    print("KERNEL_OK")
</pallas_src>

<mosaic_0001>
module attributes {stable_mosaic.version = 11 : i64} {
  func.func @_fused_kernel(%arg0: memref<64x8xf32, #tpu.memory_space<vmem>>, %arg1: memref<40x8xf32, #tpu.memory_space<vmem>>, %arg2: memref<136x128xf32, #tpu.memory_space<vmem>>, %arg3: memref<16x32xf32, #tpu.memory_space<vmem>>, %arg4: memref<40x128xf32, #tpu.memory_space<vmem>>) attributes {dimension_semantics = [], scalar_prefetch = 0 : i64, scratch_operands = 0 : i64, tpu.core_type = #tpu.core_type<tc>} {
    %c0 = arith.constant 0 : index
    %c0_0 = arith.constant 0 : index
    %0 = vector.load %arg2[%c0, %c0_0] : memref<136x128xf32, #tpu.memory_space<vmem>>, vector<8x128xf32>
    %c8 = arith.constant 8 : index
    %c0_1 = arith.constant 0 : index
    %1 = vector.load %arg2[%c8, %c0_1] : memref<136x128xf32, #tpu.memory_space<vmem>>, vector<8x128xf32>
    %c16 = arith.constant 16 : index
    %c0_2 = arith.constant 0 : index
    %2 = vector.load %arg2[%c16, %c0_2] : memref<136x128xf32, #tpu.memory_space<vmem>>, vector<32x128xf32>
    %c48 = arith.constant 48 : index
    %c0_3 = arith.constant 0 : index
    %3 = vector.load %arg2[%c48, %c0_3] : memref<136x128xf32, #tpu.memory_space<vmem>>, vector<32x128xf32>
    %c80 = arith.constant 80 : index
    %c0_4 = arith.constant 0 : index
    %4 = vector.load %arg2[%c80, %c0_4] : memref<136x128xf32, #tpu.memory_space<vmem>>, vector<1x128xf32>
    %c88 = arith.constant 88 : index
    %c0_5 = arith.constant 0 : index
    %5 = vector.load %arg2[%c88, %c0_5] : memref<136x128xf32, #tpu.memory_space<vmem>>, vector<1x128xf32>
    %c96 = arith.constant 96 : index
    %c0_6 = arith.constant 0 : index
    %6 = vector.load %arg2[%c96, %c0_6] : memref<136x128xf32, #tpu.memory_space<vmem>>, vector<32x128xf32>
    %c128 = arith.constant 128 : index
    %c0_7 = arith.constant 0 : index
    %7 = vector.load %arg2[%c128, %c0_7] : memref<136x128xf32, #tpu.memory_space<vmem>>, vector<1x128xf32>
    %c0_8 = arith.constant 0 : index
    %c0_9 = arith.constant 0 : index
    %8 = vector.load %arg3[%c0_8, %c0_9] : memref<16x32xf32, #tpu.memory_space<vmem>>, vector<8x32xf32>
    %c8_10 = arith.constant 8 : index
    %c0_11 = arith.constant 0 : index
    %9 = vector.load %arg3[%c8_10, %c0_11] : memref<16x32xf32, #tpu.memory_space<vmem>>, vector<8x32xf32>
    %c0_12 = arith.constant 0 : index
    %c0_13 = arith.constant 0 : index
    %10 = vector.load %arg0[%c0_12, %c0_13] : memref<64x8xf32, #tpu.memory_space<vmem>>, vector<64x8xf32>
    %cst = arith.constant dense<0.000000e+00> : vector<64x128xf32>
    %11 = tpu.matmul %10, %0, %cst {dimension_numbers = #tpu.dot_dimension_numbers<[1], [0], [0], [1], [0, 0, 1, 1], [], []>} : vector<64x8xf32>, vector<8x128xf32>, vector<64x128xf32> -> vector<64x128xf32>
    %12 = vector.broadcast %4 : vector<1x128xf32> to vector<64x128xf32>
    %13 = arith.addf %11, %12 : vector<64x128xf32>
    %c0_14 = arith.constant 0 : index
    %c0_15 = arith.constant 0 : index
    %14 = vector.load %arg1[%c0_14, %c0_15] : memref<40x8xf32, #tpu.memory_space<vmem>>, vector<40x8xf32>
    %cst_16 = arith.constant dense<0.000000e+00> : vector<40x128xf32>
    %15 = tpu.matmul %14, %1, %cst_16 {dimension_numbers = #tpu.dot_dimension_numbers<[1], [0], [0], [1], [0, 0, 1, 1], [], []>} : vector<40x8xf32>, vector<8x128xf32>, vector<40x128xf32> -> vector<40x128xf32>
    %16 = vector.broadcast %5 : vector<1x128xf32> to vector<40x128xf32>
    %17 = arith.addf %15, %16 : vector<40x128xf32>
    %18 = vector.extract_strided_slice %13 {offsets = [0, 0], sizes = [8, 128], strides = [1, 1]} : vector<64x128xf32> to vector<8x128xf32>
    %cst_17 = arith.constant dense<0.000000e+00> : vector<8x128xf32>
    %19 = tpu.matmul %8, %2, %cst_17 {dimension_numbers = #tpu.dot_dimension_numbers<[1], [0], [0], [1], [0, 0, 1, 1], [], []>} : vector<8x32xf32>, vector<32x128xf32>, vector<8x128xf32> -> vector<8x128xf32>
    %20 = arith.addf %18, %19 : vector<8x128xf32>
    %21 = vector.extract_strided_slice %20 {offsets = [0, 0], sizes = [8, 96], strides = [1, 1]} : vector<8x128xf32> to vector<8x96xf32>
    %22 = arith.negf %21 : vector<8x96xf32>
    %23 = math.exp %22 : vector<8x96xf32>
    %cst_18 = arith.constant 1.000000e+00 : f32
    %24 = vector.broadcast %cst_18 : f32 to vector<8x96xf32>
    %25 = arith.addf %24, %23 : vector<8x96xf32>
    %26 = arith.divf %24, %25 : vector<8x96xf32>
    %27 = vector.extract_strided_slice %20 {offsets = [0, 96], sizes = [8, 32], strides = [1, 1]} : vector<8x128xf32> to vector<8x32xf32>
    %28 = math.tanh %27 : vector<8x32xf32>
    %29 = vector.extract_strided_slice %26 {offsets = [0, 0], sizes = [8, 32], strides = [1, 1]} : vector<8x96xf32> to vector<8x32xf32>
    %30 = vector.extract_strided_slice %26 {offsets = [0, 32], sizes = [8, 32], strides = [1, 1]} : vector<8x96xf32> to vector<8x32xf32>
    %31 = vector.extract_strided_slice %26 {offsets = [0, 64], sizes = [8, 32], strides = [1, 1]} : vector<8x96xf32> to vector<8x32xf32>
    %32 = arith.mulf %30, %9 : vector<8x32xf32>
    %33 = arith.mulf %29, %28 : vector<8x32xf32>
    %34 = arith.addf %32, %33 : vector<8x32xf32>
    %35 = math.tanh %34 : vector<8x32xf32>
    %36 = arith.mulf %31, %35 : vector<8x32xf32>
    %37 = vector.extract_strided_slice %13 {offsets = [8, 0], sizes = [8, 128], strides = [1, 1]} : vector<64x128xf32> to vector<8x128xf32>
    %cst_19 = arith.constant dense<0.000000e+00> : vector<8x128xf32>
    %38 = tpu.matmul %36, %2, %cst_19 {dimension_numbers = #tpu.dot_dimension_numbers<[1], [0], [0], [1], [0, 0, 1, 1], [], []>} : vector<8x32xf32>, vector<32x128xf32>, vector<8x128xf32> -> vector<8x128xf32>
    %39 = arith.addf %37, %38 : vector<8x128xf32>
    %40 = vector.extract_strided_slice %39 {offsets = [0, 0], sizes = [8, 96], strides = [1, 1]} : vector<8x128xf32> to vector<8x96xf32>
    %41 = arith.negf %40 : vector<8x96xf32>
    %42 = math.exp %41 : vector<8x96xf32>
    %cst_20 = arith.constant 1.000000e+00 : f32
    %43 = vector.broadcast %cst_20 : f32 to vector<8x96xf32>
    %44 = arith.addf %43, %42 : vector<8x96xf32>
    %45 = arith.divf %43, %44 : vector<8x96xf32>
    %46 = vector.extract_strided_slice %39 {offsets = [0, 96], sizes = [8, 32], strides = [1, 1]} : vector<8x128xf32> to vector<8x32xf32>
    %47 = math.tanh %46 : vector<8x32xf32>
    %48 = vector.extract_strided_slice %45 {offsets = [0, 0], sizes = [8, 32], strides = [1, 1]} : vector<8x96xf32> to vector<8x32xf32>
    %49 = vector.extract_strided_slice %45 {offsets = [0, 32], sizes = [8, 32], strides = [1, 1]} : vector<8x96xf32> to vector<8x32xf32>
    %50 = vector.extract_strided_slice %45 {offsets = [0, 64], sizes = [8, 32], strides = [1, 1]} : vector<8x96xf32> to vector<8x32xf32>
    %51 = arith.mulf %49, %34 : vector<8x32xf32>
    %52 = arith.mulf %48, %47 : vector<8x32xf32>
    %53 = arith.addf %51, %52 : vector<8x32xf32>
    %54 = math.tanh %53 : vector<8x32xf32>
    %55 = arith.mulf %50, %54 : vector<8x32xf32>
    %56 = vector.extract_strided_slice %13 {offsets = [16, 0], sizes = [8, 128], strides = [1, 1]} : vector<64x128xf32> to vector<8x128xf32>
    %cst_21 = arith.constant dense<0.000000e+00> : vector<8x128xf32>
    %57 = tpu.matmul %55, %2, %cst_21 {dimension_numbers = #tpu.dot_dimension_numbers<[1], [0], [0], [1], [0, 0, 1, 1], [], []>} : vector<8x32xf32>, vector<32x128xf32>, vector<8x128xf32> -> vector<8x128xf32>
    %58 = arith.addf %56, %57 : vector<8x128xf32>
    %59 = vector.extract_strided_slice %58 {offsets = [0, 0], sizes = [8, 96], strides = [1, 1]} : vector<8x128xf32> to vector<8x96xf32>
    %60 = arith.negf %59 : vector<8x96xf32>
    %61 = math.exp %60 : vector<8x96xf32>
    %cst_22 = arith.constant 1.000000e+00 : f32
    %62 = vector.broadcast %cst_22 : f32 to vector<8x96xf32>
    %63 = arith.addf %62, %61 : vector<8x96xf32>
    %64 = arith.divf %62, %63 : vector<8x96xf32>
    %65 = vector.extract_strided_slice %58 {offsets = [0, 96], sizes = [8, 32], strides = [1, 1]} : vector<8x128xf32> to vector<8x32xf32>
    %66 = math.tanh %65 : vector<8x32xf32>
    %67 = vector.extract_strided_slice %64 {offsets = [0, 0], sizes = [8, 32], strides = [1, 1]} : vector<8x96xf32> to vector<8x32xf32>
    %68 = vector.extract_strided_slice %64 {offsets = [0, 32], sizes = [8, 32], strides = [1, 1]} : vector<8x96xf32> to vector<8x32xf32>
    %69 = vector.extract_strided_slice %64 {offsets = [0, 64], sizes = [8, 32], strides = [1, 1]} : vector<8x96xf32> to vector<8x32xf32>
    %70 = arith.mulf %68, %53 : vector<8x32xf32>
    %71 = arith.mulf %67, %66 : vector<8x32xf32>
    %72 = arith.addf %70, %71 : vector<8x32xf32>
    %73 = math.tanh %72 : vector<8x32xf32>
    %74 = arith.mulf %69, %73 : vector<8x32xf32>
    %75 = vector.extract_strided_slice %13 {offsets = [24, 0], sizes = [8, 128], strides = [1, 1]} : vector<64x128xf32> to vector<8x128xf32>
    %cst_23 = arith.constant dense<0.000000e+00> : vector<8x128xf32>
    %76 = tpu.matmul %74, %2, %cst_23 {dimension_numbers = #tpu.dot_dimension_numbers<[1], [0], [0], [1], [0, 0, 1, 1], [], []>} : vector<8x32xf32>, vector<32x128xf32>, vector<8x128xf32> -> vector<8x128xf32>
    %77 = arith.addf %75, %76 : vector<8x128xf32>
    %78 = vector.extract_strided_slice %77 {offsets = [0, 0], sizes = [8, 96], strides = [1, 1]} : vector<8x128xf32> to vector<8x96xf32>
    %79 = arith.negf %78 : vector<8x96xf32>
    %80 = math.exp %79 : vector<8x96xf32>
    %cst_24 = arith.constant 1.000000e+00 : f32
    %81 = vector.broadcast %cst_24 : f32 to vector<8x96xf32>
    %82 = arith.addf %81, %80 : vector<8x96xf32>
    %83 = arith.divf %81, %82 : vector<8x96xf32>
    %84 = vector.extract_strided_slice %77 {offsets = [0, 96], sizes = [8, 32], strides = [1, 1]} : vector<8x128xf32> to vector<8x32xf32>
    %85 = math.tanh %84 : vector<8x32xf32>
    %86 = vector.extract_strided_slice %83 {offsets = [0, 0], sizes = [8, 32], strides = [1, 1]} : vector<8x96xf32> to vector<8x32xf32>
    %87 = vector.extract_strided_slice %83 {offsets = [0, 32], sizes = [8, 32], strides = [1, 1]} : vector<8x96xf32> to vector<8x32xf32>
    %88 = vector.extract_strided_slice %83 {offsets = [0, 64], sizes = [8, 32], strides = [1, 1]} : vector<8x96xf32> to vector<8x32xf32>
    %89 = arith.mulf %87, %72 : vector<8x32xf32>
    %90 = arith.mulf %86, %85 : vector<8x32xf32>
    %91 = arith.addf %89, %90 : vector<8x32xf32>
    %92 = math.tanh %91 : vector<8x32xf32>
    %93 = arith.mulf %88, %92 : vector<8x32xf32>
    %94 = vector.extract_strided_slice %13 {offsets = [32, 0], sizes = [8, 128], strides = [1, 1]} : vector<64x128xf32> to vector<8x128xf32>
    %cst_25 = arith.constant dense<0.000000e+00> : vector<8x128xf32>
    %95 = tpu.matmul %93, %2, %cst_25 {dimension_numbers = #tpu.dot_dimension_numbers<[1], [0], [0], [1], [0, 0, 1, 1], [], []>} : vector<8x32xf32>, vector<32x128xf32>, vector<8x128xf32> -> vector<8x128xf32>
    %96 = arith.addf %94, %95 : vector<8x128xf32>
    %97 = vector.extract_strided_slice %96 {offsets = [0, 0], sizes = [8, 96], strides = [1, 1]} : vector<8x128xf32> to vector<8x96xf32>
    %98 = arith.negf %97 : vector<8x96xf32>
    %99 = math.exp %98 : vector<8x96xf32>
    %cst_26 = arith.constant 1.000000e+00 : f32
    %100 = vector.broadcast %cst_26 : f32 to vector<8x96xf32>
    %101 = arith.addf %100, %99 : vector<8x96xf32>
    %102 = arith.divf %100, %101 : vector<8x96xf32>
    %103 = vector.extract_strided_slice %96 {offsets = [0, 96], sizes = [8, 32], strides = [1, 1]} : vector<8x128xf32> to vector<8x32xf32>
    %104 = math.tanh %103 : vector<8x32xf32>
    %105 = vector.extract_strided_slice %102 {offsets = [0, 0], sizes = [8, 32], strides = [1, 1]} : vector<8x96xf32> to vector<8x32xf32>
    %106 = vector.extract_strided_slice %102 {offsets = [0, 32], sizes = [8, 32], strides = [1, 1]} : vector<8x96xf32> to vector<8x32xf32>
    %107 = vector.extract_strided_slice %102 {offsets = [0, 64], sizes = [8, 32], strides = [1, 1]} : vector<8x96xf32> to vector<8x32xf32>
    %108 = arith.mulf %106, %91 : vector<8x32xf32>
    %109 = arith.mulf %105, %104 : vector<8x32xf32>
    %110 = arith.addf %108, %109 : vector<8x32xf32>
    %111 = math.tanh %110 : vector<8x32xf32>
    %112 = arith.mulf %107, %111 : vector<8x32xf32>
    %113 = vector.extract_strided_slice %13 {offsets = [40, 0], sizes = [8, 128], strides = [1, 1]} : vector<64x128xf32> to vector<8x128xf32>
    %cst_27 = arith.constant dense<0.000000e+00> : vector<8x128xf32>
    %114 = tpu.matmul %112, %2, %cst_27 {dimension_numbers = #tpu.dot_dimension_numbers<[1], [0], [0], [1], [0, 0, 1, 1], [], []>} : vector<8x32xf32>, vector<32x128xf32>, vector<8x128xf32> -> vector<8x128xf32>
    %115 = arith.addf %113, %114 : vector<8x128xf32>
    %116 = vector.extract_strided_slice %115 {offsets = [0, 0], sizes = [8, 96], strides = [1, 1]} : vector<8x128xf32> to vector<8x96xf32>
    %117 = arith.negf %116 : vector<8x96xf32>
    %118 = math.exp %117 : vector<8x96xf32>
    %cst_28 = arith.constant 1.000000e+00 : f32
    %119 = vector.broadcast %cst_28 : f32 to vector<8x96xf32>
    %120 = arith.addf %119, %118 : vector<8x96xf32>
    %121 = arith.divf %119, %120 : vector<8x96xf32>
    %122 = vector.extract_strided_slice %115 {offsets = [0, 96], sizes = [8, 32], strides = [1, 1]} : vector<8x128xf32> to vector<8x32xf32>
    %123 = math.tanh %122 : vector<8x32xf32>
    %124 = vector.extract_strided_slice %121 {offsets = [0, 0], sizes = [8, 32], strides = [1, 1]} : vector<8x96xf32> to vector<8x32xf32>
    %125 = vector.extract_strided_slice %121 {offsets = [0, 32], sizes = [8, 32], strides = [1, 1]} : vector<8x96xf32> to vector<8x32xf32>
    %126 = vector.extract_strided_slice %121 {offsets = [0, 64], sizes = [8, 32], strides = [1, 1]} : vector<8x96xf32> to vector<8x32xf32>
    %127 = arith.mulf %125, %110 : vector<8x32xf32>
    %128 = arith.mulf %124, %123 : vector<8x32xf32>
    %129 = arith.addf %127, %128 : vector<8x32xf32>
    %130 = math.tanh %129 : vector<8x32xf32>
    %131 = arith.mulf %126, %130 : vector<8x32xf32>
    %132 = vector.extract_strided_slice %13 {offsets = [48, 0], sizes = [8, 128], strides = [1, 1]} : vector<64x128xf32> to vector<8x128xf32>
    %cst_29 = arith.constant dense<0.000000e+00> : vector<8x128xf32>
    %133 = tpu.matmul %131, %2, %cst_29 {dimension_numbers = #tpu.dot_dimension_numbers<[1], [0], [0], [1], [0, 0, 1, 1], [], []>} : vector<8x32xf32>, vector<32x128xf32>, vector<8x128xf32> -> vector<8x128xf32>
    %134 = arith.addf %132, %133 : vector<8x128xf32>
    %135 = vector.extract_strided_slice %134 {offsets = [0, 0], sizes = [8, 96], strides = [1, 1]} : vector<8x128xf32> to vector<8x96xf32>
    %136 = arith.negf %135 : vector<8x96xf32>
    %137 = math.exp %136 : vector<8x96xf32>
    %cst_30 = arith.constant 1.000000e+00 : f32
    %138 = vector.broadcast %cst_30 : f32 to vector<8x96xf32>
    %139 = arith.addf %138, %137 : vector<8x96xf32>
    %140 = arith.divf %138, %139 : vector<8x96xf32>
    %141 = vector.extract_strided_slice %134 {offsets = [0, 96], sizes = [8, 32], strides = [1, 1]} : vector<8x128xf32> to vector<8x32xf32>
    %142 = math.tanh %141 : vector<8x32xf32>
    %143 = vector.extract_strided_slice %140 {offsets = [0, 0], sizes = [8, 32], strides = [1, 1]} : vector<8x96xf32> to vector<8x32xf32>
    %144 = vector.extract_strided_slice %140 {offsets = [0, 32], sizes = [8, 32], strides = [1, 1]} : vector<8x96xf32> to vector<8x32xf32>
    %145 = vector.extract_strided_slice %140 {offsets = [0, 64], sizes = [8, 32], strides = [1, 1]} : vector<8x96xf32> to vector<8x32xf32>
    %146 = arith.mulf %144, %129 : vector<8x32xf32>
    %147 = arith.mulf %143, %142 : vector<8x32xf32>
    %148 = arith.addf %146, %147 : vector<8x32xf32>
    %149 = math.tanh %148 : vector<8x32xf32>
    %150 = arith.mulf %145, %149 : vector<8x32xf32>
    %151 = vector.extract_strided_slice %13 {offsets = [56, 0], sizes = [8, 128], strides = [1, 1]} : vector<64x128xf32> to vector<8x128xf32>
    %cst_31 = arith.constant dense<0.000000e+00> : vector<8x128xf32>
    %152 = tpu.matmul %150, %2, %cst_31 {dimension_numbers = #tpu.dot_dimension_numbers<[1], [0], [0], [1], [0, 0, 1, 1], [], []>} : vector<8x32xf32>, vector<32x128xf32>, vector<8x128xf32> -> vector<8x128xf32>
    %153 = arith.addf %151, %152 : vector<8x128xf32>
    %154 = vector.extract_strided_slice %153 {offsets = [0, 0], sizes = [8, 96], strides = [1, 1]} : vector<8x128xf32> to vector<8x96xf32>
    %155 = arith.negf %154 : vector<8x96xf32>
    %156 = math.exp %155 : vector<8x96xf32>
    %cst_32 = arith.constant 1.000000e+00 : f32
    %157 = vector.broadcast %cst_32 : f32 to vector<8x96xf32>
    %158 = arith.addf %157, %156 : vector<8x96xf32>
    %159 = arith.divf %157, %158 : vector<8x96xf32>
    %160 = vector.extract_strided_slice %153 {offsets = [0, 96], sizes = [8, 32], strides = [1, 1]} : vector<8x128xf32> to vector<8x32xf32>
    %161 = math.tanh %160 : vector<8x32xf32>
    %162 = vector.extract_strided_slice %159 {offsets = [0, 0], sizes = [8, 32], strides = [1, 1]} : vector<8x96xf32> to vector<8x32xf32>
    %163 = vector.extract_strided_slice %159 {offsets = [0, 32], sizes = [8, 32], strides = [1, 1]} : vector<8x96xf32> to vector<8x32xf32>
    %164 = vector.extract_strided_slice %159 {offsets = [0, 64], sizes = [8, 32], strides = [1, 1]} : vector<8x96xf32> to vector<8x32xf32>
    %165 = arith.mulf %163, %148 : vector<8x32xf32>
    %166 = arith.mulf %162, %161 : vector<8x32xf32>
    %167 = arith.addf %165, %166 : vector<8x32xf32>
    %168 = math.tanh %167 : vector<8x32xf32>
    %169 = arith.mulf %164, %168 : vector<8x32xf32>
    %170 = vector.extract_strided_slice %17 {offsets = [0, 0], sizes = [8, 128], strides = [1, 1]} : vector<40x128xf32> to vector<8x128xf32>
    %cst_33 = arith.constant dense<0.000000e+00> : vector<8x128xf32>
    %171 = tpu.matmul %169, %3, %cst_33 {dimension_numbers = #tpu.dot_dimension_numbers<[1], [0], [0], [1], [0, 0, 1, 1], [], []>} : vector<8x32xf32>, vector<32x128xf32>, vector<8x128xf32> -> vector<8x128xf32>
    %172 = arith.addf %170, %171 : vector<8x128xf32>
    %173 = vector.extract_strided_slice %172 {offsets = [0, 0], sizes = [8, 96], strides = [1, 1]} : vector<8x128xf32> to vector<8x96xf32>
    %174 = arith.negf %173 : vector<8x96xf32>
    %175 = math.exp %174 : vector<8x96xf32>
    %cst_34 = arith.constant 1.000000e+00 : f32
    %176 = vector.broadcast %cst_34 : f32 to vector<8x96xf32>
    %177 = arith.addf %176, %175 : vector<8x96xf32>
    %178 = arith.divf %176, %177 : vector<8x96xf32>
    %179 = vector.extract_strided_slice %172 {offsets = [0, 96], sizes = [8, 32], strides = [1, 1]} : vector<8x128xf32> to vector<8x32xf32>
    %180 = math.tanh %179 : vector<8x32xf32>
    %181 = vector.extract_strided_slice %178 {offsets = [0, 0], sizes = [8, 32], strides = [1, 1]} : vector<8x96xf32> to vector<8x32xf32>
    %182 = vector.extract_strided_slice %178 {offsets = [0, 32], sizes = [8, 32], strides = [1, 1]} : vector<8x96xf32> to vector<8x32xf32>
    %183 = vector.extract_strided_slice %178 {offsets = [0, 64], sizes = [8, 32], strides = [1, 1]} : vector<8x96xf32> to vector<8x32xf32>
    %184 = arith.mulf %182, %167 : vector<8x32xf32>
    %185 = arith.mulf %181, %180 : vector<8x32xf32>
    %186 = arith.addf %184, %185 : vector<8x32xf32>
    %187 = math.tanh %186 : vector<8x32xf32>
    %188 = arith.mulf %183, %187 : vector<8x32xf32>
    %189 = vector.extract_strided_slice %17 {offsets = [8, 0], sizes = [8, 128], strides = [1, 1]} : vector<40x128xf32> to vector<8x128xf32>
    %cst_35 = arith.constant dense<0.000000e+00> : vector<8x128xf32>
    %190 = tpu.matmul %188, %3, %cst_35 {dimension_numbers = #tpu.dot_dimension_numbers<[1], [0], [0], [1], [0, 0, 1, 1], [], []>} : vector<8x32xf32>, vector<32x128xf32>, vector<8x128xf32> -> vector<8x128xf32>
    %191 = arith.addf %189, %190 : vector<8x128xf32>
    %192 = vector.extract_strided_slice %191 {offsets = [0, 0], sizes = [8, 96], strides = [1, 1]} : vector<8x128xf32> to vector<8x96xf32>
    %193 = arith.negf %192 : vector<8x96xf32>
    %194 = math.exp %193 : vector<8x96xf32>
    %cst_36 = arith.constant 1.000000e+00 : f32
    %195 = vector.broadcast %cst_36 : f32 to vector<8x96xf32>
    %196 = arith.addf %195, %194 : vector<8x96xf32>
    %197 = arith.divf %195, %196 : vector<8x96xf32>
    %198 = vector.extract_strided_slice %191 {offsets = [0, 96], sizes = [8, 32], strides = [1, 1]} : vector<8x128xf32> to vector<8x32xf32>
    %199 = math.tanh %198 : vector<8x32xf32>
    %200 = vector.extract_strided_slice %197 {offsets = [0, 0], sizes = [8, 32], strides = [1, 1]} : vector<8x96xf32> to vector<8x32xf32>
    %201 = vector.extract_strided_slice %197 {offsets = [0, 32], sizes = [8, 32], strides = [1, 1]} : vector<8x96xf32> to vector<8x32xf32>
    %202 = vector.extract_strided_slice %197 {offsets = [0, 64], sizes = [8, 32], strides = [1, 1]} : vector<8x96xf32> to vector<8x32xf32>
    %203 = arith.mulf %201, %186 : vector<8x32xf32>
    %204 = arith.mulf %200, %199 : vector<8x32xf32>
    %205 = arith.addf %203, %204 : vector<8x32xf32>
    %206 = math.tanh %205 : vector<8x32xf32>
    %207 = arith.mulf %202, %206 : vector<8x32xf32>
    %208 = vector.extract_strided_slice %17 {offsets = [16, 0], sizes = [8, 128], strides = [1, 1]} : vector<40x128xf32> to vector<8x128xf32>
    %cst_37 = arith.constant dense<0.000000e+00> : vector<8x128xf32>
    %209 = tpu.matmul %207, %3, %cst_37 {dimension_numbers = #tpu.dot_dimension_numbers<[1], [0], [0], [1], [0, 0, 1, 1], [], []>} : vector<8x32xf32>, vector<32x128xf32>, vector<8x128xf32> -> vector<8x128xf32>
    %210 = arith.addf %208, %209 : vector<8x128xf32>
    %211 = vector.extract_strided_slice %210 {offsets = [0, 0], sizes = [8, 96], strides = [1, 1]} : vector<8x128xf32> to vector<8x96xf32>
    %212 = arith.negf %211 : vector<8x96xf32>
    %213 = math.exp %212 : vector<8x96xf32>
    %cst_38 = arith.constant 1.000000e+00 : f32
    %214 = vector.broadcast %cst_38 : f32 to vector<8x96xf32>
    %215 = arith.addf %214, %213 : vector<8x96xf32>
    %216 = arith.divf %214, %215 : vector<8x96xf32>
    %217 = vector.extract_strided_slice %210 {offsets = [0, 96], sizes = [8, 32], strides = [1, 1]} : vector<8x128xf32> to vector<8x32xf32>
    %218 = math.tanh %217 : vector<8x32xf32>
    %219 = vector.extract_strided_slice %216 {offsets = [0, 0], sizes = [8, 32], strides = [1, 1]} : vector<8x96xf32> to vector<8x32xf32>
    %220 = vector.extract_strided_slice %216 {offsets = [0, 32], sizes = [8, 32], strides = [1, 1]} : vector<8x96xf32> to vector<8x32xf32>
    %221 = vector.extract_strided_slice %216 {offsets = [0, 64], sizes = [8, 32], strides = [1, 1]} : vector<8x96xf32> to vector<8x32xf32>
    %222 = arith.mulf %220, %205 : vector<8x32xf32>
    %223 = arith.mulf %219, %218 : vector<8x32xf32>
    %224 = arith.addf %222, %223 : vector<8x32xf32>
    %225 = math.tanh %224 : vector<8x32xf32>
    %226 = arith.mulf %221, %225 : vector<8x32xf32>
    %227 = vector.extract_strided_slice %17 {offsets = [24, 0], sizes = [8, 128], strides = [1, 1]} : vector<40x128xf32> to vector<8x128xf32>
    %cst_39 = arith.constant dense<0.000000e+00> : vector<8x128xf32>
    %228 = tpu.matmul %226, %3, %cst_39 {dimension_numbers = #tpu.dot_dimension_numbers<[1], [0], [0], [1], [0, 0, 1, 1], [], []>} : vector<8x32xf32>, vector<32x128xf32>, vector<8x128xf32> -> vector<8x128xf32>
    %229 = arith.addf %227, %228 : vector<8x128xf32>
    %230 = vector.extract_strided_slice %229 {offsets = [0, 0], sizes = [8, 96], strides = [1, 1]} : vector<8x128xf32> to vector<8x96xf32>
    %231 = arith.negf %230 : vector<8x96xf32>
    %232 = math.exp %231 : vector<8x96xf32>
    %cst_40 = arith.constant 1.000000e+00 : f32
    %233 = vector.broadcast %cst_40 : f32 to vector<8x96xf32>
    %234 = arith.addf %233, %232 : vector<8x96xf32>
    %235 = arith.divf %233, %234 : vector<8x96xf32>
    %236 = vector.extract_strided_slice %229 {offsets = [0, 96], sizes = [8, 32], strides = [1, 1]} : vector<8x128xf32> to vector<8x32xf32>
    %237 = math.tanh %236 : vector<8x32xf32>
    %238 = vector.extract_strided_slice %235 {offsets = [0, 0], sizes = [8, 32], strides = [1, 1]} : vector<8x96xf32> to vector<8x32xf32>
    %239 = vector.extract_strided_slice %235 {offsets = [0, 32], sizes = [8, 32], strides = [1, 1]} : vector<8x96xf32> to vector<8x32xf32>
    %240 = vector.extract_strided_slice %235 {offsets = [0, 64], sizes = [8, 32], strides = [1, 1]} : vector<8x96xf32> to vector<8x32xf32>
    %241 = arith.mulf %239, %224 : vector<8x32xf32>
    %242 = arith.mulf %238, %237 : vector<8x32xf32>
    %243 = arith.addf %241, %242 : vector<8x32xf32>
    %244 = math.tanh %243 : vector<8x32xf32>
    %245 = arith.mulf %240, %244 : vector<8x32xf32>
    %246 = vector.extract_strided_slice %17 {offsets = [32, 0], sizes = [8, 128], strides = [1, 1]} : vector<40x128xf32> to vector<8x128xf32>
    %cst_41 = arith.constant dense<0.000000e+00> : vector<8x128xf32>
    %247 = tpu.matmul %245, %3, %cst_41 {dimension_numbers = #tpu.dot_dimension_numbers<[1], [0], [0], [1], [0, 0, 1, 1], [], []>} : vector<8x32xf32>, vector<32x128xf32>, vector<8x128xf32> -> vector<8x128xf32>
    %248 = arith.addf %246, %247 : vector<8x128xf32>
    %249 = vector.extract_strided_slice %248 {offsets = [0, 0], sizes = [8, 96], strides = [1, 1]} : vector<8x128xf32> to vector<8x96xf32>
    %250 = arith.negf %249 : vector<8x96xf32>
    %251 = math.exp %250 : vector<8x96xf32>
    %cst_42 = arith.constant 1.000000e+00 : f32
    %252 = vector.broadcast %cst_42 : f32 to vector<8x96xf32>
    %253 = arith.addf %252, %251 : vector<8x96xf32>
    %254 = arith.divf %252, %253 : vector<8x96xf32>
    %255 = vector.extract_strided_slice %248 {offsets = [0, 96], sizes = [8, 32], strides = [1, 1]} : vector<8x128xf32> to vector<8x32xf32>
    %256 = math.tanh %255 : vector<8x32xf32>
    %257 = vector.extract_strided_slice %254 {offsets = [0, 0], sizes = [8, 32], strides = [1, 1]} : vector<8x96xf32> to vector<8x32xf32>
    %258 = vector.extract_strided_slice %254 {offsets = [0, 32], sizes = [8, 32], strides = [1, 1]} : vector<8x96xf32> to vector<8x32xf32>
    %259 = vector.extract_strided_slice %254 {offsets = [0, 64], sizes = [8, 32], strides = [1, 1]} : vector<8x96xf32> to vector<8x32xf32>
    %260 = arith.mulf %258, %243 : vector<8x32xf32>
    %261 = arith.mulf %257, %256 : vector<8x32xf32>
    %262 = arith.addf %260, %261 : vector<8x32xf32>
    %263 = math.tanh %262 : vector<8x32xf32>
    %264 = arith.mulf %259, %263 : vector<8x32xf32>
    %265 = tpu.concatenate %188, %207, %226, %245, %264 in 0 : vector<8x32xf32>, vector<8x32xf32>, vector<8x32xf32>, vector<8x32xf32>, vector<8x32xf32> -> vector<40x32xf32>
    %cst_43 = arith.constant 0.000000e+00 : f32
    %266 = vector.broadcast %cst_43 : f32 to vector<40x32xf32>
    %267 = arith.maximumf %265, %266 : vector<40x32xf32>
    %cst_44 = arith.constant dense<0.000000e+00> : vector<40x128xf32>
    %268 = tpu.matmul %267, %6, %cst_44 {dimension_numbers = #tpu.dot_dimension_numbers<[1], [0], [0], [1], [0, 0, 1, 1], [], []>} : vector<40x32xf32>, vector<32x128xf32>, vector<40x128xf32> -> vector<40x128xf32>
    %269 = vector.broadcast %7 : vector<1x128xf32> to vector<40x128xf32>
    %270 = arith.addf %268, %269 : vector<40x128xf32>
    %c0_45 = arith.constant 0 : index
    %c0_46 = arith.constant 0 : index
    %271 = vector.load %arg4[%c0_45, %c0_46] : memref<40x128xf32, #tpu.memory_space<vmem>>, vector<40x128xf32>
    tpu.vector_store %arg4[%c0_45, %c0_46], %270 {strides = array<i32>} : memref<40x128xf32, #tpu.memory_space<vmem>>, vector<40x128xf32>,
    return
  }
}

</mosaic_0001>

<llo_original>
// kernel: maize_lstm_forward.1
$region0: #{maize_lstm_forward.1}
  #allocation0 [shape = 'u32[]', space=smem, size = 0x4, offset = 0x4, fixed_abs, tag = 'smem constant byte address 0x4 - core index']
  #allocation1 [shape = 'u32[144,128]{1,0:T(1,128)}', space=vmem, size = 0x12000, scoped, tag = 'internal scratch']
  %s0 = inlined_call_operand.vmem [shape: f32[64,8], index: 0, kind: input, shape index: {}]
  %s1 = inlined_call_operand.vmem [shape: f32[40,8], index: 1, kind: input, shape index: {}]
  %s2 = inlined_call_operand.vmem [shape: f32[136,128], index: 2, kind: input, shape index: {}]
  %s3 = inlined_call_operand.vmem [shape: f32[16,32], index: 3, kind: input, shape index: {}]
  %s4 = inlined_call_operand.vmem [shape: f32[40,128], index: 4, kind: output, shape index: {}]
  %s5 = sld [smem:[#allocation0]]
  $region26: #{maize_lstm_forward.1} parent=0
    _
  %s7 = ssub.s32 1, %s5
  %s8 = scalar_select 0, %s7, %s5
  // Predicated region
  $region2: #{maize_lstm_forward.1} parent=0 // pred_check
    _
  $region3: #{maize_lstm_forward.1} parent=0 // pred_check_branch
    %10 = sbr.rel (0) target = $region5
  $region4: #{maize_lstm_forward.1} parent=0 // pred_region
    _
  $region5: #{maize_lstm_forward.1} parent=0 // pred_fallthru
    _
  // Predicated region
  $region6: #{maize_lstm_forward.1} parent=0 // pred_check
    _
  $region7: #{maize_lstm_forward.1} parent=0 // pred_check_branch
    %12 = sbr.rel (0) target = $region9
  $region8: #{maize_lstm_forward.1} parent=0 // pred_region
    _
  $region9: #{maize_lstm_forward.1} parent=0 // pred_fallthru
    _
  // Predicated region
  $region10: #{maize_lstm_forward.1} parent=0 // pred_check
    _
  $region11: #{maize_lstm_forward.1} parent=0 // pred_check_branch
    %14 = sbr.rel (0) target = $region13
  $region12: #{maize_lstm_forward.1} parent=0 // pred_region
    _
  $region13: #{maize_lstm_forward.1} parent=0 // pred_fallthru
    _
  // Predicated region
  $region14: #{maize_lstm_forward.1} parent=0 // pred_check
    _
  $region15: #{maize_lstm_forward.1} parent=0 // pred_check_branch
    %16 = sbr.rel (0) target = $region17
  $region16: #{maize_lstm_forward.1} parent=0 // pred_region
    _
  $region17: #{maize_lstm_forward.1} parent=0 // pred_fallthru
    _
  %v17 = vld [vmem:[%s2] sm:$0xff]
  %v18 = vld [vmem:[%s2 + $0x8] sm:$0xff]
  %v19 = vld [vmem:[%s2 + $0x10] sm:$0xff]
  %v20 = vld [vmem:[%s2 + $0x18] sm:$0xff]
  %v21 = vld [vmem:[%s2 + $0x20] sm:$0xff]
  %v22 = vld [vmem:[%s2 + $0x28] sm:$0xff]
  %v23 = vld [vmem:[%s2 + $0x30] sm:$0xff]
  %v24 = vld [vmem:[%s2 + $0x38] sm:$0xff]
  %v25 = vld [vmem:[%s2 + $0x40] sm:$0xff]
  %v26 = vld [vmem:[%s2 + $0x48] sm:$0xff]
  %v27 = vld [vmem:[%s2 + $0x50] sm:$0x1]
  %v28 = vld [vmem:[%s2 + $0x58] sm:$0x1]
  %v29 = vld [vmem:[%s2 + $0x60] sm:$0xff]
  %v30 = vld [vmem:[%s2 + $0x68] sm:$0xff]
  %v31 = vld [vmem:[%s2 + $0x70] sm:$0xff]
  %v32 = vld [vmem:[%s2 + $0x78] sm:$0xff]
  %v33 = vld [vmem:[%s2 + $0x80] sm:$0x1]
  %v34 = vld [vmem:[%s3] sm:$0xff]
  %v35 = vld [vmem:[%s3 + $0x8] sm:$0xff]
  %v36 = vld [vmem:[%s0] sm:$0xff]
  %v37 = vld [vmem:[%s0 + $0x8] sm:$0xff]
  %v38 = vld [vmem:[%s0 + $0x10] sm:$0xff]
  %v39 = vld [vmem:[%s0 + $0x18] sm:$0xff]
  %v40 = vld [vmem:[%s0 + $0x20] sm:$0xff]
  %v41 = vld [vmem:[%s0 + $0x28] sm:$0xff]
  %v42 = vld [vmem:[%s0 + $0x30] sm:$0xff]
  %v43 = vld [vmem:[%s0 + $0x38] sm:$0xff]
  %v44 = vlaneseq
  %v45 = vshrl.u32 %v44, 7
  %v46 = vsub.s32 0, %v45
  %v47 = vrot.slane %v27, %v46
  %vm48 = vcmask 64512
  %v50 = vsel %vm48, %v36, 0
  %v53 = vsel %vm48, %v37, 0
  %v56 = vsel %vm48, %v38, 0
  %v59 = vsel %vm48, %v39, 0
  %v62 = vsel %vm48, %v40, 0
  %v65 = vsel %vm48, %v41, 0
  %v68 = vsel %vm48, %v42, 0
  %v71 = vsel %vm48, %v43, 0
  %73 = vmatprep.subr.mxu0 0.0
  %74 = vmatpush1.msra.mxu0 0.0
  %75 = vmatprep.subr.mxu0 0.0
  %76 = vmatpush1.msra.mxu0 0.0
  %77 = vmatprep.subr.mxu0 0.0
  %78 = vmatpush1.msra.mxu0 0.0
  %79 = vmatprep.subr.mxu0 0.0
  %80 = vmatpush1.msra.mxu0 0.0
  %81 = vmatprep.subr.mxu0 0.0
  %82 = vmatpush1.msra.mxu0 0.0
  %83 = vmatprep.subr.mxu0 0.0
  %84 = vmatpush1.msra.mxu0 0.0
  %85 = vmatprep.subr.mxu0 0.0
  %86 = vmatpush1.msra.mxu0 0.0
  %87 = vmatprep.subr.mxu0 0.0
  %88 = vmatpush1.msra.mxu0 0.0
  %89 = vmatprep.subr.mxu0 0.0
  %90 = vmatpush1.msra.mxu0 0.0
  %91 = vmatprep.subr.mxu0 0.0
  %92 = vmatpush1.msra.mxu0 0.0
  %93 = vmatprep.subr.mxu0 0.0
  %94 = vmatpush1.msra.mxu0 0.0
  %95 = vmatprep.subr.mxu0 0.0
  %96 = vmatpush1.msra.mxu0 0.0
  %97 = vmatprep.subr.mxu0 0.0
  %98 = vmatpush1.msra.mxu0 0.0
  %99 = vmatprep.subr.mxu0 0.0
  %100 = vmatpush1.msra.mxu0 0.0
  %101 = vmatprep.subr.mxu0 0.0
  %102 = vmatpush1.msra.mxu0 0.0
  %103 = vmatprep.subr.mxu0 0.0
  %104 = vmatpush1.msra.mxu0 %v17
  %105 = vmatprep.subr.mxu0 0.0
  %106 = vmatpush2.msra.mxu0 0.0
  %107 = vmatprep.subr.mxu0 0.0
  %108 = vmatpush2.msra.mxu0 0.0
  %109 = vmatprep.subr.mxu0 0.0
  %110 = vmatpush2.msra.mxu0 0.0
  %111 = vmatprep.subr.mxu0 0.0
  %112 = vmatpush2.msra.mxu0 0.0
  %113 = vmatprep.subr.mxu0 0.0
  %114 = vmatpush2.msra.mxu0 0.0
  %115 = vmatprep.subr.mxu0 0.0
  %116 = vmatpush2.msra.mxu0 0.0
  %117 = vmatprep.subr.mxu0 0.0
  %118 = vmatpush2.msra.mxu0 0.0
  %119 = vmatprep.subr.mxu0 0.0
  %120 = vmatpush2.msra.mxu0 0.0
  %121 = vmatprep.subr.mxu0 0.0
  %122 = vmatpush2.msra.mxu0 0.0
  %123 = vmatprep.subr.mxu0 0.0
  %124 = vmatpush2.msra.mxu0 0.0
  %125 = vmatprep.subr.mxu0 0.0
  %126 = vmatpush2.msra.mxu0 0.0
  %127 = vmatprep.subr.mxu0 0.0
  %128 = vmatpush2.msra.mxu0 0.0
  %129 = vmatprep.subr.mxu0 0.0
  %130 = vmatpush2.msra.mxu0 0.0
  %131 = vmatprep.subr.mxu0 0.0
  %132 = vmatpush2.msra.mxu0 0.0
  %133 = vmatprep.subr.mxu0 0.0
  %134 = vmatpush2.msra.mxu0 0.0
  %135 = vmatprep.subr.mxu0 0.0
  %136 = vmatpush2.msra.mxu0 0.0
  %137 = vmatprep.mubr.f32.mxu0 0.0
  %138 = vmatmul.mubr.f32.gmra.mxu0 %v50
  %v139 = vpop.f32.mrf.mxu0
  %v140 = vadd.f32 %v47, %v139
  %v141 = vpop.f32.mrf.mxu0
  %142 = vmatprep.mubr.f32.mxu0 0.0
  %143 = vmatmul.mubr.f32.gmra.mxu0 %v53
  %v144 = vpop.f32.mrf.mxu0
  %v145 = vadd.f32 %v47, %v144
  %v146 = vpop.f32.mrf.mxu0
  %147 = vmatprep.mubr.f32.mxu0 0.0
  %148 = vmatmul.mubr.f32.gmra.mxu0 %v56
  %v149 = vpop.f32.mrf.mxu0
  %v150 = vadd.f32 %v47, %v149
  %v151 = vpop.f32.mrf.mxu0
  %152 = vmatprep.mubr.f32.mxu0 0.0
  %153 = vmatmul.mubr.f32.gmra.mxu0 %v59
  %v154 = vpop.f32.mrf.mxu0
  %v155 = vadd.f32 %v47, %v154
  %v156 = vpop.f32.mrf.mxu0
  %157 = vmatprep.mubr.f32.mxu0 0.0
  %158 = vmatmul.mubr.f32.gmra.mxu0 %v62
  %v159 = vpop.f32.mrf.mxu0
  %v160 = vadd.f32 %v47, %v159
  %v161 = vpop.f32.mrf.mxu0
  %162 = vmatprep.mubr.f32.mxu0 0.0
  %163 = vmatmul.mubr.f32.gmra.mxu0 %v65
  %v164 = vpop.f32.mrf.mxu0
  %v165 = vadd.f32 %v47, %v164
  %v166 = vpop.f32.mrf.mxu0
  %167 = vmatprep.mubr.f32.mxu0 0.0
  %168 = vmatmul.mubr.f32.gmra.mxu0 %v68
  %v169 = vpop.f32.mrf.mxu0
  %v170 = vadd.f32 %v47, %v169
  %v171 = vpop.f32.mrf.mxu0
  %172 = vmatprep.mubr.f32.mxu0 0.0
  %173 = vmatmul.mubr.f32.gmra.mxu0 %v71
  %v174 = vpop.f32.mrf.mxu0
  %v175 = vadd.f32 %v47, %v174
  %v176 = vpop.f32.mrf.mxu0
  %177 = vdwg.mxu0
  %v178 = vld [vmem:[%s1] sm:$0xff]
  %v179 = vld [vmem:[%s1 + $0x8] sm:$0xff]
  %v180 = vld [vmem:[%s1 + $0x10] sm:$0xff]
  %v181 = vld [vmem:[%s1 + $0x18] sm:$0xff]
  %v182 = vld [vmem:[%s1 + $0x20] sm:$0xff]
  %v183 = vlaneseq
  %v184 = vshrl.u32 %v183, 7
  %v185 = vsub.s32 0, %v184
  %v186 = vrot.slane %v28, %v185
  %v188 = vsel %vm48, %v178, 0
  %v191 = vsel %vm48, %v179, 0
  %v194 = vsel %vm48, %v180, 0
  %v197 = vsel %vm48, %v181, 0
  %v200 = vsel %vm48, %v182, 0
  %202 = vmatprep.subr.mxu0 0.0
  %203 = vmatpush1.msra.mxu0 0.0
  %204 = vmatprep.subr.mxu0 0.0
  %205 = vmatpush1.msra.mxu0 0.0
  %206 = vmatprep.subr.mxu0 0.0
  %207 = vmatpush1.msra.mxu0 0.0
  %208 = vmatprep.subr.mxu0 0.0
  %209 = vmatpush1.msra.mxu0 0.0
  %210 = vmatprep.subr.mxu0 0.0
  %211 = vmatpush1.msra.mxu0 0.0
  %212 = vmatprep.subr.mxu0 0.0
  %213 = vmatpush1.msra.mxu0 0.0
  %214 = vmatprep.subr.mxu0 0.0
  %215 = vmatpush1.msra.mxu0 0.0
  %216 = vmatprep.subr.mxu0 0.0
  %217 = vmatpush1.msra.mxu0 0.0
  %218 = vmatprep.subr.mxu0 0.0
  %219 = vmatpush1.msra.mxu0 0.0
  %220 = vmatprep.subr.mxu0 0.0
  %221 = vmatpush1.msra.mxu0 0.0
  %222 = vmatprep.subr.mxu0 0.0
  %223 = vmatpush1.msra.mxu0 0.0
  %224 = vmatprep.subr.mxu0 0.0
  %225 = vmatpush1.msra.mxu0 0.0
  %226 = vmatprep.subr.mxu0 0.0
  %227 = vmatpush1.msra.mxu0 0.0
  %228 = vmatprep.subr.mxu0 0.0
  %229 = vmatpush1.msra.mxu0 0.0
  %230 = vmatprep.subr.mxu0 0.0
  %231 = vmatpush1.msra.mxu0 0.0
  %232 = vmatprep.subr.mxu0 0.0
  %233 = vmatpush1.msra.mxu0 %v18
  %234 = vmatprep.subr.mxu0 0.0
  %235 = vmatpush2.msra.mxu0 0.0
  %236 = vmatprep.subr.mxu0 0.0
  %237 = vmatpush2.msra.mxu0 0.0
  %238 = vmatprep.subr.mxu0 0.0
  %239 = vmatpush2.msra.mxu0 0.0
  %240 = vmatprep.subr.mxu0 0.0
  %241 = vmatpush2.msra.mxu0 0.0
  %242 = vmatprep.subr.mxu0 0.0
  %243 = vmatpush2.msra.mxu0 0.0
  %244 = vmatprep.subr.mxu0 0.0
  %245 = vmatpush2.msra.mxu0 0.0
  %246 = vmatprep.subr.mxu0 0.0
  %247 = vmatpush2.msra.mxu0 0.0
  %248 = vmatprep.subr.mxu0 0.0
  %249 = vmatpush2.msra.mxu0 0.0
  %250 = vmatprep.subr.mxu0 0.0
  %251 = vmatpush2.msra.mxu0 0.0
  %252 = vmatprep.subr.mxu0 0.0
  %253 = vmatpush2.msra.mxu0 0.0
  %254 = vmatprep.subr.mxu0 0.0
  %255 = vmatpush2.msra.mxu0 0.0
  %256 = vmatprep.subr.mxu0 0.0
  %257 = vmatpush2.msra.mxu0 0.0
  %258 = vmatprep.subr.mxu0 0.0
  %259 = vmatpush2.msra.mxu0 0.0
  %260 = vmatprep.subr.mxu0 0.0
  %261 = vmatpush2.msra.mxu0 0.0
  %262 = vmatprep.subr.mxu0 0.0
  %263 = vmatpush2.msra.mxu0 0.0
  %264 = vmatprep.subr.mxu0 0.0
  %265 = vmatpush2.msra.mxu0 0.0
  %266 = vmatprep.mubr.f32.mxu0 0.0
  %267 = vmatmul.mubr.f32.gmra.mxu0 %v188
  %v268 = vpop.f32.mrf.mxu0
  %v269 = vadd.f32 %v186, %v268
  %v270 = vpop.f32.mrf.mxu0
  %271 = vmatprep.mubr.f32.mxu0 0.0
  %272 = vmatmul.mubr.f32.gmra.mxu0 %v191
  %v273 = vpop.f32.mrf.mxu0
  %v274 = vadd.f32 %v186, %v273
  %v275 = vpop.f32.mrf.mxu0
  %276 = vmatprep.mubr.f32.mxu0 0.0
  %277 = vmatmul.mubr.f32.gmra.mxu0 %v194
  %v278 = vpop.f32.mrf.mxu0
  %v279 = vadd.f32 %v186, %v278
  %v280 = vpop.f32.mrf.mxu0
  %281 = vmatprep.mubr.f32.mxu0 0.0
  %282 = vmatmul.mubr.f32.gmra.mxu0 %v197
  %v283 = vpop.f32.mrf.mxu0
  %v284 = vadd.f32 %v186, %v283
  %v285 = vpop.f32.mrf.mxu0
  %286 = vmatprep.mubr.f32.mxu0 0.0
  %287 = vmatmul.mubr.f32.gmra.mxu0 %v200
  %v288 = vpop.f32.mrf.mxu0
  %v289 = vadd.f32 %v186, %v288
  %v290 = vpop.f32.mrf.mxu0
  %291 = vdwg.mxu0
  %vm292 = vcmask 261120
  %v294 = vsel %vm292, %v34, 0
  %296 = vmatprep.subr.mxu0 0.0
  %297 = vmatpush1.msra.mxu0 0.0
  %298 = vmatprep.subr.mxu0 0.0
  %299 = vmatpush1.msra.mxu0 0.0
  %300 = vmatprep.subr.mxu0 0.0
  %301 = vmatpush1.msra.mxu0 0.0
  %302 = vmatprep.subr.mxu0 0.0
  %303 = vmatpush1.msra.mxu0 0.0
  %304 = vmatprep.subr.mxu0 0.0
  %305 = vmatpush1.msra.mxu0 0.0
  %306 = vmatprep.subr.mxu0 0.0
  %307 = vmatpush1.msra.mxu0 0.0
  %308 = vmatprep.subr.mxu0 0.0
  %309 = vmatpush1.msra.mxu0 0.0
  %310 = vmatprep.subr.mxu0 0.0
  %311 = vmatpush1.msra.mxu0 0.0
  %312 = vmatprep.subr.mxu0 0.0
  %313 = vmatpush1.msra.mxu0 0.0
  %314 = vmatprep.subr.mxu0 0.0
  %315 = vmatpush1.msra.mxu0 0.0
  %316 = vmatprep.subr.mxu0 0.0
  %317 = vmatpush1.msra.mxu0 0.0
  %318 = vmatprep.subr.mxu0 0.0
  %319 = vmatpush1.msra.mxu0 0.0
  %320 = vmatprep.subr.mxu0 0.0
  %321 = vmatpush1.msra.mxu0 %v22
  %322 = vmatprep.subr.mxu0 0.0
  %323 = vmatpush1.msra.mxu0 %v21
  %324 = vmatprep.subr.mxu0 0.0
  %325 = vmatpush1.msra.mxu0 %v20
  %326 = vmatprep.subr.mxu0 0.0
  %327 = vmatpush1.msra.mxu0 %v19
  %328 = vmatprep.subr.mxu0 0.0
  %329 = vmatpush2.msra.mxu0 0.0
  %330 = vmatprep.subr.mxu0 0.0
  %331 = vmatpush2.msra.mxu0 0.0
  %332 = vmatprep.subr.mxu0 0.0
  %333 = vmatpush2.msra.mxu0 0.0
  %334 = vmatprep.subr.mxu0 0.0
  %335 = vmatpush2.msra.mxu0 0.0
  %336 = vmatprep.subr.mxu0 0.0
  %337 = vmatpush2.msra.mxu0 0.0
  %338 = vmatprep.subr.mxu0 0.0
  %339 = vmatpush2.msra.mxu0 0.0
  %340 = vmatprep.subr.mxu0 0.0
  %341 = vmatpush2.msra.mxu0 0.0
  %342 = vmatprep.subr.mxu0 0.0
  %343 = vmatpush2.msra.mxu0 0.0
  %344 = vmatprep.subr.mxu0 0.0
  %345 = vmatpush2.msra.mxu0 0.0
  %346 = vmatprep.subr.mxu0 0.0
  %347 = vmatpush2.msra.mxu0 0.0
  %348 = vmatprep.subr.mxu0 0.0
  %349 = vmatpush2.msra.mxu0 0.0
  %350 = vmatprep.subr.mxu0 0.0
  %351 = vmatpush2.msra.mxu0 0.0
  %352 = vmatprep.subr.mxu0 0.0
  %353 = vmatpush2.msra.mxu0 0.0
  %354 = vmatprep.subr.mxu0 0.0
  %355 = vmatpush2.msra.mxu0 0.0
  %356 = vmatprep.subr.mxu0 0.0
  %357 = vmatpush2.msra.mxu0 0.0
  %358 = vmatprep.subr.mxu0 0.0
  %359 = vmatpush2.msra.mxu0 0.0
  %360 = vmatprep.mubr.f32.mxu0 0.0
  %361 = vmatmul.mubr.f32.gmra.mxu0 %v294
  %v362 = vpop.f32.mrf.mxu0
  %v363 = vadd.f32 0.0, %v362
  %v364 = vpop.f32.mrf.mxu0
  %365 = vdwg.mxu0
  %v366 = vadd.f32 %v140, %v363
  %v367 = vxor.u32 %v366, 2147483648
  %v368 = vmul.f32 %v367, 1.442695
  %v369 = vpow.pop %v368
  %v370 = vadd.f32 %v369, 1.0
  %v371 = vrcp.pop %v370
  %v372 = vmul.f32 1.0, %v371
  %v373 = vtanh.pop %v366
  %375 = vrot.lane.b32.xlu0 %v35, 32
  %v376 = vpop.permute.xlu0 %375
  %v378 = vmul.f32 %v372, %v376
  %380 = vrot.lane.b32.xlu0 %v373, 32
  %v381 = vpop.permute.xlu0 %380
  %v383 = vmul.f32 %v372, %v381
  %385 = vrot.lane.b32.xlu0 %v383, 32
  %v386 = vpop.permute.xlu0 %385
  %v388 = vadd.f32 %v378, %v386
  %v389 = vtanh.pop %v388
  %391 = vrot.lane.b32.xlu0 %v389, 32
  %v392 = vpop.permute.xlu0 %391
  %v394 = vmul.f32 %v372, %v392
  %396 = vrot.lane.b32.xlu0 %v394, 64
  %v397 = vpop.permute.xlu0 %396
  %v398 = vsel %vm292, %v397, 0
  %400 = vmatprep.subr.mxu0 0.0
  %401 = vmatpush1.msra.mxu0 0.0
  %402 = vmatprep.subr.mxu0 0.0
  %403 = vmatpush1.msra.mxu0 0.0
  %404 = vmatprep.subr.mxu0 0.0
  %405 = vmatpush1.msra.mxu0 0.0
  %406 = vmatprep.subr.mxu0 0.0
  %407 = vmatpush1.msra.mxu0 0.0
  %408 = vmatprep.subr.mxu0 0.0
  %409 = vmatpush1.msra.mxu0 0.0
  %410 = vmatprep.subr.mxu0 0.0
  %411 = vmatpush1.msra.mxu0 0.0
  %412 = vmatprep.subr.mxu0 0.0
  %413 = vmatpush1.msra.mxu0 0.0
  %414 = vmatprep.subr.mxu0 0.0
  %415 = vmatpush1.msra.mxu0 0.0
  %416 = vmatprep.subr.mxu0 0.0
  %417 = vmatpush1.msra.mxu0 0.0
  %418 = vmatprep.subr.mxu0 0.0
  %419 = vmatpush1.msra.mxu0 0.0
  %420 = vmatprep.subr.mxu0 0.0
  %421 = vmatpush1.msra.mxu0 0.0
  %422 = vmatprep.subr.mxu0 0.0
  %423 = vmatpush1.msra.mxu0 0.0
  %424 = vmatprep.subr.mxu0 0.0
  %425 = vmatpush1.msra.mxu0 %v22
  %426 = vmatprep.subr.mxu0 0.0
  %427 = vmatpush1.msra.mxu0 %v21
  %428 = vmatprep.subr.mxu0 0.0
  %429 = vmatpush1.msra.mxu0 %v20
  %430 = vmatprep.subr.mxu0 0.0
  %431 = vmatpush1.msra.mxu0 %v19
  %432 = vmatprep.subr.mxu0 0.0
  %433 = vmatpush2.msra.mxu0 0.0
  %434 = vmatprep.subr.mxu0 0.0
  %435 = vmatpush2.msra.mxu0 0.0
  %436 = vmatprep.subr.mxu0 0.0
  %437 = vmatpush2.msra.mxu0 0.0
  %438 = vmatprep.subr.mxu0 0.0
  %439 = vmatpush2.msra.mxu0 0.0
  %440 = vmatprep.subr.mxu0 0.0
  %441 = vmatpush2.msra.mxu0 0.0
  %442 = vmatprep.subr.mxu0 0.0
  %443 = vmatpush2.msra.mxu0 0.0
  %444 = vmatprep.subr.mxu0 0.0
  %445 = vmatpush2.msra.mxu0 0.0
  %446 = vmatprep.subr.mxu0 0.0
  %447 = vmatpush2.msra.mxu0 0.0
  %448 = vmatprep.subr.mxu0 0.0
  %449 = vmatpush2.msra.mxu0 0.0
  %450 = vmatprep.subr.mxu0 0.0
  %451 = vmatpush2.msra.mxu0 0.0
  %452 = vmatprep.subr.mxu0 0.0
  %453 = vmatpush2.msra.mxu0 0.0
  %454 = vmatprep.subr.mxu0 0.0
  %455 = vmatpush2.msra.mxu0 0.0
  %456 = vmatprep.subr.mxu0 0.0
  %457 = vmatpush2.msra.mxu0 0.0
  %458 = vmatprep.subr.mxu0 0.0
  %459 = vmatpush2.msra.mxu0 0.0
  %460 = vmatprep.subr.mxu0 0.0
  %461 = vmatpush2.msra.mxu0 0.0
  %462 = vmatprep.subr.mxu0 0.0
  %463 = vmatpush2.msra.mxu0 0.0
  %464 = vmatprep.mubr.f32.mxu0 0.0
  %465 = vmatmul.mubr.f32.gmra.mxu0 %v398
  %v466 = vpop.f32.mrf.mxu0
  %v467 = vadd.f32 0.0, %v466
  %v468 = vpop.f32.mrf.mxu0
  %469 = vdwg.mxu0
  %v470 = vadd.f32 %v145, %v467
  %v471 = vxor.u32 %v470, 2147483648
  %v472 = vmul.f32 %v471, 1.442695
  %v473 = vpow.pop %v472
  %v474 = vadd.f32 %v473, 1.0
  %v475 = vrcp.pop %v474
  %v476 = vmul.f32 1.0, %v475
  %v477 = vtanh.pop %v470
  %v478 = vmul.f32 %v476, %v388
  %480 = vrot.lane.b32.xlu0 %v477, 32
  %v481 = vpop.permute.xlu0 %480
  %v483 = vmul.f32 %v476, %v481
  %485 = vrot.lane.b32.xlu0 %v483, 32
  %v486 = vpop.permute.xlu0 %485
  %v488 = vadd.f32 %v478, %v486
  %v489 = vtanh.pop %v488
  %491 = vrot.lane.b32.xlu0 %v489, 32
  %v492 = vpop.permute.xlu0 %491
  %v494 = vmul.f32 %v476, %v492
  %496 = vrot.lane.b32.xlu0 %v494, 64
  %v497 = vpop.permute.xlu0 %496
  %v498 = vsel %vm292, %v497, 0
  %500 = vmatprep.subr.mxu0 0.0
  %501 = vmatpush1.msra.mxu0 0.0
  %502 = vmatprep.subr.mxu0 0.0
  %503 = vmatpush1.msra.mxu0 0.0
  %504 = vmatprep.subr.mxu0 0.0
  %505 = vmatpush1.msra.mxu0 0.0
  %506 = vmatprep.subr.mxu0 0.0
  %507 = vmatpush1.msra.mxu0 0.0
  %508 = vmatprep.subr.mxu0 0.0
  %509 = vmatpush1.msra.mxu0 0.0
  %510 = vmatprep.subr.mxu0 0.0
  %511 = vmatpush1.msra.mxu0 0.0
  %512 = vmatprep.subr.mxu0 0.0
  %513 = vmatpush1.msra.mxu0 0.0
  %514 = vmatprep.subr.mxu0 0.0
  %515 = vmatpush1.msra.mxu0 0.0
  %516 = vmatprep.subr.mxu0 0.0
  %517 = vmatpush1.msra.mxu0 0.0
  %518 = vmatprep.subr.mxu0 0.0
  %519 = vmatpush1.msra.mxu0 0.0
  %520 = vmatprep.subr.mxu0 0.0
  %521 = vmatpush1.msra.mxu0 0.0
  %522 = vmatprep.subr.mxu0 0.0
  %523 = vmatpush1.msra.mxu0 0.0
  %524 = vmatprep.subr.mxu0 0.0
  %525 = vmatpush1.msra.mxu0 %v22
  %526 = vmatprep.subr.mxu0 0.0
  %527 = vmatpush1.msra.mxu0 %v21
  %528 = vmatprep.subr.mxu0 0.0
  %529 = vmatpush1.msra.mxu0 %v20
  %530 = vmatprep.subr.mxu0 0.0
  %531 = vmatpush1.msra.mxu0 %v19
  %532 = vmatprep.subr.mxu0 0.0
  %533 = vmatpush2.msra.mxu0 0.0
  %534 = vmatprep.subr.mxu0 0.0
  %535 = vmatpush2.msra.mxu0 0.0
  %536 = vmatprep.subr.mxu0 0.0
  %537 = vmatpush2.msra.mxu0 0.0
  %538 = vmatprep.subr.mxu0 0.0
  %539 = vmatpush2.msra.mxu0 0.0
  %540 = vmatprep.subr.mxu0 0.0
  %541 = vmatpush2.msra.mxu0 0.0
  %542 = vmatprep.subr.mxu0 0.0
  %543 = vmatpush2.msra.mxu0 0.0
  %544 = vmatprep.subr.mxu0 0.0
  %545 = vmatpush2.msra.mxu0 0.0
  %546 = vmatprep.subr.mxu0 0.0
  %547 = vmatpush2.msra.mxu0 0.0
  %548 = vmatprep.subr.mxu0 0.0
  %549 = vmatpush2.msra.mxu0 0.0
  %550 = vmatprep.subr.mxu0 0.0
  %551 = vmatpush2.msra.mxu0 0.0
  %552 = vmatprep.subr.mxu0 0.0
  %553 = vmatpush2.msra.mxu0 0.0
  %554 = vmatprep.subr.mxu0 0.0
  %555 = vmatpush2.msra.mxu0 0.0
  %556 = vmatprep.subr.mxu0 0.0
  %557 = vmatpush2.msra.mxu0 0.0
  %558 = vmatprep.subr.mxu0 0.0
  %559 = vmatpush2.msra.mxu0 0.0
  %560 = vmatprep.subr.mxu0 0.0
  %561 = vmatpush2.msra.mxu0 0.0
  %562 = vmatprep.subr.mxu0 0.0
  %563 = vmatpush2.msra.mxu0 0.0
  %564 = vmatprep.mubr.f32.mxu0 0.0
  %565 = vmatmul.mubr.f32.gmra.mxu0 %v498
  %v566 = vpop.f32.mrf.mxu0
  %v567 = vadd.f32 0.0, %v566
  %v568 = vpop.f32.mrf.mxu0
  %569 = vdwg.mxu0
  %v570 = vadd.f32 %v150, %v567
  %v571 = vxor.u32 %v570, 2147483648
  %v572 = vmul.f32 %v571, 1.442695
  %v573 = vpow.pop %v572
  %v574 = vadd.f32 %v573, 1.0
  %v575 = vrcp.pop %v574
  %v576 = vmul.f32 1.0, %v575
  %v577 = vtanh.pop %v570
  %v578 = vmul.f32 %v576, %v488
  %580 = vrot.lane.b32.xlu0 %v577, 32
  %v581 = vpop.permute.xlu0 %580
  %v583 = vmul.f32 %v576, %v581
  %585 = vrot.lane.b32.xlu0 %v583, 32
  %v586 = vpop.permute.xlu0 %585
  %v588 = vadd.f32 %v578, %v586
  %v589 = vtanh.pop %v588
  %591 = vrot.lane.b32.xlu0 %v589, 32
  %v592 = vpop.permute.xlu0 %591
  %v594 = vmul.f32 %v576, %v592
  %596 = vrot.lane.b32.xlu0 %v594, 64
  %v597 = vpop.permute.xlu0 %596
  %v598 = vsel %vm292, %v597, 0
  %600 = vmatprep.subr.mxu0 0.0
  %601 = vmatpush1.msra.mxu0 0.0
  %602 = vmatprep.subr.mxu0 0.0
  %603 = vmatpush1.msra.mxu0 0.0
  %604 = vmatprep.subr.mxu0 0.0
  %605 = vmatpush1.msra.mxu0 0.0
  %606 = vmatprep.subr.mxu0 0.0
  %607 = vmatpush1.msra.mxu0 0.0
  %608 = vmatprep.subr.mxu0 0.0
  %609 = vmatpush1.msra.mxu0 0.0
  %610 = vmatprep.subr.mxu0 0.0
  %611 = vmatpush1.msra.mxu0 0.0
  %612 = vmatprep.subr.mxu0 0.0
  %613 = vmatpush1.msra.mxu0 0.0
  %614 = vmatprep.subr.mxu0 0.0
  %615 = vmatpush1.msra.mxu0 0.0
  %616 = vmatprep.subr.mxu0 0.0
  %617 = vmatpush1.msra.mxu0 0.0
  %618 = vmatprep.subr.mxu0 0.0
  %619 = vmatpush1.msra.mxu0 0.0
  %620 = vmatprep.subr.mxu0 0.0
  %621 = vmatpush1.msra.mxu0 0.0
  %622 = vmatprep.subr.mxu0 0.0
  %623 = vmatpush1.msra.mxu0 0.0
  %624 = vmatprep.subr.mxu0 0.0
  %625 = vmatpush1.msra.mxu0 %v22
  %626 = vmatprep.subr.mxu0 0.0
  %627 = vmatpush1.msra.mxu0 %v21
  %628 = vmatprep.subr.mxu0 0.0
  %629 = vmatpush1.msra.mxu0 %v20
  %630 = vmatprep.subr.mxu0 0.0
  %631 = vmatpush1.msra.mxu0 %v19
  %632 = vmatprep.subr.mxu0 0.0
  %633 = vmatpush2.msra.mxu0 0.0
  %634 = vmatprep.subr.mxu0 0.0
  %635 = vmatpush2.msra.mxu0 0.0
  %636 = vmatprep.subr.mxu0 0.0
  %637 = vmatpush2.msra.mxu0 0.0
  %638 = vmatprep.subr.mxu0 0.0
  %639 = vmatpush2.msra.mxu0 0.0
  %640 = vmatprep.subr.mxu0 0.0
  %641 = vmatpush2.msra.mxu0 0.0
  %642 = vmatprep.subr.mxu0 0.0
  %643 = vmatpush2.msra.mxu0 0.0
  %644 = vmatprep.subr.mxu0 0.0
  %645 = vmatpush2.msra.mxu0 0.0
  %646 = vmatprep.subr.mxu0 0.0
  %647 = vmatpush2.msra.mxu0 0.0
  %648 = vmatprep.subr.mxu0 0.0
  %649 = vmatpush2.msra.mxu0 0.0
  %650 = vmatprep.subr.mxu0 0.0
  %651 = vmatpush2.msra.mxu0 0.0
  %652 = vmatprep.subr.mxu0 0.0
  %653 = vmatpush2.msra.mxu0 0.0
  %654 = vmatprep.subr.mxu0 0.0
  %655 = vmatpush2.msra.mxu0 0.0
  %656 = vmatprep.subr.mxu0 0.0
  %657 = vmatpush2.msra.mxu0 0.0
  %658 = vmatprep.subr.mxu0 0.0
  %659 = vmatpush2.msra.mxu0 0.0
  %660 = vmatprep.subr.mxu0 0.0
  %661 = vmatpush2.msra.mxu0 0.0
  %662 = vmatprep.subr.mxu0 0.0
  %663 = vmatpush2.msra.mxu0 0.0
  %664 = vmatprep.mubr.f32.mxu0 0.0
  %665 = vmatmul.mubr.f32.gmra.mxu0 %v598
  %v666 = vpop.f32.mrf.mxu0
  %v667 = vadd.f32 0.0, %v666
  %v668 = vpop.f32.mrf.mxu0
  %669 = vdwg.mxu0
  %v670 = vadd.f32 %v155, %v667
  %v671 = vxor.u32 %v670, 2147483648
  %v672 = vmul.f32 %v671, 1.442695
  %v673 = vpow.pop %v672
  %v674 = vadd.f32 %v673, 1.0
  %v675 = vrcp.pop %v674
  %v676 = vmul.f32 1.0, %v675
  %v677 = vtanh.pop %v670
  %v678 = vmul.f32 %v676, %v588
  %680 = vrot.lane.b32.xlu0 %v677, 32
  %v681 = vpop.permute.xlu0 %680
  %v683 = vmul.f32 %v676, %v681
  %685 = vrot.lane.b32.xlu0 %v683, 32
  %v686 = vpop.permute.xlu0 %685
  %v688 = vadd.f32 %v678, %v686
  %v689 = vtanh.pop %v688
  %691 = vrot.lane.b32.xlu0 %v689, 32
  %v692 = vpop.permute.xlu0 %691
  %v694 = vmul.f32 %v676, %v692
  %696 = vrot.lane.b32.xlu0 %v694, 64
  %v697 = vpop.permute.xlu0 %696
  %v698 = vsel %vm292, %v697, 0
  %700 = vmatprep.subr.mxu0 0.0
  %701 = vmatpush1.msra.mxu0 0.0
  %702 = vmatprep.subr.mxu0 0.0
  %703 = vmatpush1.msra.mxu0 0.0
  %704 = vmatprep.subr.mxu0 0.0
  %705 = vmatpush1.msra.mxu0 0.0
  %706 = vmatprep.subr.mxu0 0.0
  %707 = vmatpush1.msra.mxu0 0.0
  %708 = vmatprep.subr.mxu0 0.0
  %709 = vmatpush1.msra.mxu0 0.0
  %710 = vmatprep.subr.mxu0 0.0
  %711 = vmatpush1.msra.mxu0 0.0
  %712 = vmatprep.subr.mxu0 0.0
  %713 = vmatpush1.msra.mxu0 0.0
  %714 = vmatprep.subr.mxu0 0.0
  %715 = vmatpush1.msra.mxu0 0.0
  %716 = vmatprep.subr.mxu0 0.0
  %717 = vmatpush1.msra.mxu0 0.0
  %718 = vmatprep.subr.mxu0 0.0
  %719 = vmatpush1.msra.mxu0 0.0
  %720 = vmatprep.subr.mxu0 0.0
  %721 = vmatpush1.msra.mxu0 0.0
  %722 = vmatprep.subr.mxu0 0.0
  %723 = vmatpush1.msra.mxu0 0.0
  %724 = vmatprep.subr.mxu0 0.0
  %725 = vmatpush1.msra.mxu0 %v22
  %726 = vmatprep.subr.mxu0 0.0
  %727 = vmatpush1.msra.mxu0 %v21
  %728 = vmatprep.subr.mxu0 0.0
  %729 = vmatpush1.msra.mxu0 %v20
  %730 = vmatprep.subr.mxu0 0.0
  %731 = vmatpush1.msra.mxu0 %v19
  %732 = vmatprep.subr.mxu0 0.0
  %733 = vmatpush2.msra.mxu0 0.0
  %734 = vmatprep.subr.mxu0 0.0
  %735 = vmatpush2.msra.mxu0 0.0
  %736 = vmatprep.subr.mxu0 0.0
  %737 = vmatpush2.msra.mxu0 0.0
  %738 = vmatprep.subr.mxu0 0.0
  %739 = vmatpush2.msra.mxu0 0.0
  %740 = vmatprep.subr.mxu0 0.0
  %741 = vmatpush2.msra.mxu0 0.0
  %742 = vmatprep.subr.mxu0 0.0
  %743 = vmatpush2.msra.mxu0 0.0
  %744 = vmatprep.subr.mxu0 0.0
  %745 = vmatpush2.msra.mxu0 0.0
  %746 = vmatprep.subr.mxu0 0.0
  %747 = vmatpush2.msra.mxu0 0.0
  %748 = vmatprep.subr.mxu0 0.0
  %749 = vmatpush2.msra.mxu0 0.0
  %750 = vmatprep.subr.mxu0 0.0
  %751 = vmatpush2.msra.mxu0 0.0
  %752 = vmatprep.subr.mxu0 0.0
  %753 = vmatpush2.msra.mxu0 0.0
  %754 = vmatprep.subr.mxu0 0.0
  %755 = vmatpush2.msra.mxu0 0.0
  %756 = vmatprep.subr.mxu0 0.0
  %757 = vmatpush2.msra.mxu0 0.0
  %758 = vmatprep.subr.mxu0 0.0
  %759 = vmatpush2.msra.mxu0 0.0
  %760 = vmatprep.subr.mxu0 0.0
  %761 = vmatpush2.msra.mxu0 0.0
  %762 = vmatprep.subr.mxu0 0.0
  %763 = vmatpush2.msra.mxu0 0.0
  %764 = vmatprep.mubr.f32.mxu0 0.0
  %765 = vmatmul.mubr.f32.gmra.mxu0 %v698
  %v766 = vpop.f32.mrf.mxu0
  %v767 = vadd.f32 0.0, %v766
  %v768 = vpop.f32.mrf.mxu0
  %769 = vdwg.mxu0
  %v770 = vadd.f32 %v160, %v767
  %v771 = vxor.u32 %v770, 2147483648
  %v772 = vmul.f32 %v771, 1.442695
  %v773 = vpow.pop %v772
  %v774 = vadd.f32 %v773, 1.0
  %v775 = vrcp.pop %v774
  %v776 = vmul.f32 1.0, %v775
  %v777 = vtanh.pop %v770
  %v778 = vmul.f32 %v776, %v688
  %780 = vrot.lane.b32.xlu0 %v777, 32
  %v781 = vpop.permute.xlu0 %780
  %v783 = vmul.f32 %v776, %v781
  %785 = vrot.lane.b32.xlu0 %v783, 32
  %v786 = vpop.permute.xlu0 %785
  %v788 = vadd.f32 %v778, %v786
  %v789 = vtanh.pop %v788
  %791 = vrot.lane.b32.xlu0 %v789, 32
  %v792 = vpop.permute.xlu0 %791
  %v794 = vmul.f32 %v776, %v792
  %796 = vrot.lane.b32.xlu0 %v794, 64
  %v797 = vpop.permute.xlu0 %796
  %v798 = vsel %vm292, %v797, 0
  %800 = vmatprep.subr.mxu0 0.0
  %801 = vmatpush1.msra.mxu0 0.0
  %802 = vmatprep.subr.mxu0 0.0
  %803 = vmatpush1.msra.mxu0 0.0
  %804 = vmatprep.subr.mxu0 0.0
  %805 = vmatpush1.msra.mxu0 0.0
  %806 = vmatprep.subr.mxu0 0.0
  %807 = vmatpush1.msra.mxu0 0.0
  %808 = vmatprep.subr.mxu0 0.0
  %809 = vmatpush1.msra.mxu0 0.0
  %810 = vmatprep.subr.mxu0 0.0
  %811 = vmatpush1.msra.mxu0 0.0
  %812 = vmatprep.subr.mxu0 0.0
  %813 = vmatpush1.msra.mxu0 0.0
  %814 = vmatprep.subr.mxu0 0.0
  %815 = vmatpush1.msra.mxu0 0.0
  %816 = vmatprep.subr.mxu0 0.0
  %817 = vmatpush1.msra.mxu0 0.0
  %818 = vmatprep.subr.mxu0 0.0
  %819 = vmatpush1.msra.mxu0 0.0
  %820 = vmatprep.subr.mxu0 0.0
  %821 = vmatpush1.msra.mxu0 0.0
  %822 = vmatprep.subr.mxu0 0.0
  %823 = vmatpush1.msra.mxu0 0.0
  %824 = vmatprep.subr.mxu0 0.0
  %825 = vmatpush1.msra.mxu0 %v22
  %826 = vmatprep.subr.mxu0 0.0
  %827 = vmatpush1.msra.mxu0 %v21
  %828 = vmatprep.subr.mxu0 0.0
  %829 = vmatpush1.msra.mxu0 %v20
  %830 = vmatprep.subr.mxu0 0.0
  %831 = vmatpush1.msra.mxu0 %v19
  %832 = vmatprep.subr.mxu0 0.0
  %833 = vmatpush2.msra.mxu0 0.0
  %834 = vmatprep.subr.mxu0 0.0
  %835 = vmatpush2.msra.mxu0 0.0
  %836 = vmatprep.subr.mxu0 0.0
  %837 = vmatpush2.msra.mxu0 0.0
  %838 = vmatprep.subr.mxu0 0.0
  %839 = vmatpush2.msra.mxu0 0.0
  %840 = vmatprep.subr.mxu0 0.0
  %841 = vmatpush2.msra.mxu0 0.0
  %842 = vmatprep.subr.mxu0 0.0
  %843 = vmatpush2.msra.mxu0 0.0
  %844 = vmatprep.subr.mxu0 0.0
  %845 = vmatpush2.msra.mxu0 0.0
  %846 = vmatprep.subr.mxu0 0.0
  %847 = vmatpush2.msra.mxu0 0.0
  %848 = vmatprep.subr.mxu0 0.0
  %849 = vmatpush2.msra.mxu0 0.0
  %850 = vmatprep.subr.mxu0 0.0
  %851 = vmatpush2.msra.mxu0 0.0
  %852 = vmatprep.subr.mxu0 0.0
  %853 = vmatpush2.msra.mxu0 0.0
  %854 = vmatprep.subr.mxu0 0.0
  %855 = vmatpush2.msra.mxu0 0.0
  %856 = vmatprep.subr.mxu0 0.0
  %857 = vmatpush2.msra.mxu0 0.0
  %858 = vmatprep.subr.mxu0 0.0
  %859 = vmatpush2.msra.mxu0 0.0
  %860 = vmatprep.subr.mxu0 0.0
  %861 = vmatpush2.msra.mxu0 0.0
  %862 = vmatprep.subr.mxu0 0.0
  %863 = vmatpush2.msra.mxu0 0.0
  %864 = vmatprep.mubr.f32.mxu0 0.0
  %865 = vmatmul.mubr.f32.gmra.mxu0 %v798
  %v866 = vpop.f32.mrf.mxu0
  %v867 = vadd.f32 0.0, %v866
  %v868 = vpop.f32.mrf.mxu0
  %869 = vdwg.mxu0
  %v870 = vadd.f32 %v165, %v867
  %v871 = vxor.u32 %v870, 2147483648
  %v872 = vmul.f32 %v871, 1.442695
  %v873 = vpow.pop %v872
  %v874 = vadd.f32 %v873, 1.0
  %v875 = vrcp.pop %v874
  %v876 = vmul.f32 1.0, %v875
  %v877 = vtanh.pop %v870
  %v878 = vmul.f32 %v876, %v788
  %880 = vrot.lane.b32.xlu0 %v877, 32
  %v881 = vpop.permute.xlu0 %880
  %v883 = vmul.f32 %v876, %v881
  %885 = vrot.lane.b32.xlu0 %v883, 32
  %v886 = vpop.permute.xlu0 %885
  %v888 = vadd.f32 %v878, %v886
  %v889 = vtanh.pop %v888
  %891 = vrot.lane.b32.xlu0 %v889, 32
  %v892 = vpop.permute.xlu0 %891
  %v894 = vmul.f32 %v876, %v892
  %896 = vrot.lane.b32.xlu0 %v894, 64
  %v897 = vpop.permute.xlu0 %896
  %v898 = vsel %vm292, %v897, 0
  %900 = vmatprep.subr.mxu0 0.0
  %901 = vmatpush1.msra.mxu0 0.0
  %902 = vmatprep.subr.mxu0 0.0
  %903 = vmatpush1.msra.mxu0 0.0
  %904 = vmatprep.subr.mxu0 0.0
  %905 = vmatpush1.msra.mxu0 0.0
  %906 = vmatprep.subr.mxu0 0.0
  %907 = vmatpush1.msra.mxu0 0.0
  %908 = vmatprep.subr.mxu0 0.0
  %909 = vmatpush1.msra.mxu0 0.0
  %910 = vmatprep.subr.mxu0 0.0
  %911 = vmatpush1.msra.mxu0 0.0
  %912 = vmatprep.subr.mxu0 0.0
  %913 = vmatpush1.msra.mxu0 0.0
  %914 = vmatprep.subr.mxu0 0.0
  %915 = vmatpush1.msra.mxu0 0.0
  %916 = vmatprep.subr.mxu0 0.0
  %917 = vmatpush1.msra.mxu0 0.0
  %918 = vmatprep.subr.mxu0 0.0
  %919 = vmatpush1.msra.mxu0 0.0
  %920 = vmatprep.subr.mxu0 0.0
  %921 = vmatpush1.msra.mxu0 0.0
  %922 = vmatprep.subr.mxu0 0.0
  %923 = vmatpush1.msra.mxu0 0.0
  %924 = vmatprep.subr.mxu0 0.0
  %925 = vmatpush1.msra.mxu0 %v22
  %926 = vmatprep.subr.mxu0 0.0
  %927 = vmatpush1.msra.mxu0 %v21
  %928 = vmatprep.subr.mxu0 0.0
  %929 = vmatpush1.msra.mxu0 %v20
  %930 = vmatprep.subr.mxu0 0.0
  %931 = vmatpush1.msra.mxu0 %v19
  %932 = vmatprep.subr.mxu0 0.0
  %933 = vmatpush2.msra.mxu0 0.0
  %934 = vmatprep.subr.mxu0 0.0
  %935 = vmatpush2.msra.mxu0 0.0
  %936 = vmatprep.subr.mxu0 0.0
  %937 = vmatpush2.msra.mxu0 0.0
  %938 = vmatprep.subr.mxu0 0.0
  %939 = vmatpush2.msra.mxu0 0.0
  %940 = vmatprep.subr.mxu0 0.0
  %941 = vmatpush2.msra.mxu0 0.0
  %942 = vmatprep.subr.mxu0 0.0
  %943 = vmatpush2.msra.mxu0 0.0
  %944 = vmatprep.subr.mxu0 0.0
  %945 = vmatpush2.msra.mxu0 0.0
  %946 = vmatprep.subr.mxu0 0.0
  %947 = vmatpush2.msra.mxu0 0.0
  %948 = vmatprep.subr.mxu0 0.0
  %949 = vmatpush2.msra.mxu0 0.0
  %950 = vmatprep.subr.mxu0 0.0
  %951 = vmatpush2.msra.mxu0 0.0
  %952 = vmatprep.subr.mxu0 0.0
  %953 = vmatpush2.msra.mxu0 0.0
  %954 = vmatprep.subr.mxu0 0.0
  %955 = vmatpush2.msra.mxu0 0.0
  %956 = vmatprep.subr.mxu0 0.0
  %957 = vmatpush2.msra.mxu0 0.0
  %958 = vmatprep.subr.mxu0 0.0
  %959 = vmatpush2.msra.mxu0 0.0
  %960 = vmatprep.subr.mxu0 0.0
  %961 = vmatpush2.msra.mxu0 0.0
  %962 = vmatprep.subr.mxu0 0.0
  %963 = vmatpush2.msra.mxu0 0.0
  %964 = vmatprep.mubr.f32.mxu0 0.0
  %965 = vmatmul.mubr.f32.gmra.mxu0 %v898
  %v966 = vpop.f32.mrf.mxu0
  %v967 = vadd.f32 0.0, %v966
  %v968 = vpop.f32.mrf.mxu0
  %969 = vdwg.mxu0
  %v970 = vadd.f32 %v170, %v967
  %v971 = vxor.u32 %v970, 2147483648
  %v972 = vmul.f32 %v971, 1.442695
  %v973 = vpow.pop %v972
  %v974 = vadd.f32 %v973, 1.0
  %v975 = vrcp.pop %v974
  %v976 = vmul.f32 1.0, %v975
  %v977 = vtanh.pop %v970
  %v978 = vmul.f32 %v976, %v888
  %980 = vrot.lane.b32.xlu0 %v977, 32
  %v981 = vpop.permute.xlu0 %980
  %v983 = vmul.f32 %v976, %v981
  %985 = vrot.lane.b32.xlu0 %v983, 32
  %v986 = vpop.permute.xlu0 %985
  %v988 = vadd.f32 %v978, %v986
  %v989 = vtanh.pop %v988
  %991 = vrot.lane.b32.xlu0 %v989, 32
  %v992 = vpop.permute.xlu0 %991
  %v994 = vmul.f32 %v976, %v992
  %996 = vrot.lane.b32.xlu0 %v994, 64
  %v997 = vpop.permute.xlu0 %996
  %v998 = vsel %vm292, %v997, 0
  %1000 = vmatprep.subr.mxu0 0.0
  %1001 = vmatpush1.msra.mxu0 0.0
  %1002 = vmatprep.subr.mxu0 0.0
  %1003 = vmatpush1.msra.mxu0 0.0
  %1004 = vmatprep.subr.mxu0 0.0
  %1005 = vmatpush1.msra.mxu0 0.0
  %1006 = vmatprep.subr.mxu0 0.0
  %1007 = vmatpush1.msra.mxu0 0.0
  %1008 = vmatprep.subr.mxu0 0.0
  %1009 = vmatpush1.msra.mxu0 0.0
  %1010 = vmatprep.subr.mxu0 0.0
  %1011 = vmatpush1.msra.mxu0 0.0
  %1012 = vmatprep.subr.mxu0 0.0
  %1013 = vmatpush1.msra.mxu0 0.0
  %1014 = vmatprep.subr.mxu0 0.0
  %1015 = vmatpush1.msra.mxu0 0.0
  %1016 = vmatprep.subr.mxu0 0.0
  %1017 = vmatpush1.msra.mxu0 0.0
  %1018 = vmatprep.subr.mxu0 0.0
  %1019 = vmatpush1.msra.mxu0 0.0
  %1020 = vmatprep.subr.mxu0 0.0
  %1021 = vmatpush1.msra.mxu0 0.0
  %1022 = vmatprep.subr.mxu0 0.0
  %1023 = vmatpush1.msra.mxu0 0.0
  %1024 = vmatprep.subr.mxu0 0.0
  %1025 = vmatpush1.msra.mxu0 %v22
  %1026 = vmatprep.subr.mxu0 0.0
  %1027 = vmatpush1.msra.mxu0 %v21
  %1028 = vmatprep.subr.mxu0 0.0
  %1029 = vmatpush1.msra.mxu0 %v20
  %1030 = vmatprep.subr.mxu0 0.0
  %1031 = vmatpush1.msra.mxu0 %v19
  %1032 = vmatprep.subr.mxu0 0.0
  %1033 = vmatpush2.msra.mxu0 0.0
  %1034 = vmatprep.subr.mxu0 0.0
  %1035 = vmatpush2.msra.mxu0 0.0
  %1036 = vmatprep.subr.mxu0 0.0
  %1037 = vmatpush2.msra.mxu0 0.0
  %1038 = vmatprep.subr.mxu0 0.0
  %1039 = vmatpush2.msra.mxu0 0.0
  %1040 = vmatprep.subr.mxu0 0.0
  %1041 = vmatpush2.msra.mxu0 0.0
  %1042 = vmatprep.subr.mxu0 0.0
  %1043 = vmatpush2.msra.mxu0 0.0
  %1044 = vmatprep.subr.mxu0 0.0
  %1045 = vmatpush2.msra.mxu0 0.0
  %1046 = vmatprep.subr.mxu0 0.0
  %1047 = vmatpush2.msra.mxu0 0.0
  %1048 = vmatprep.subr.mxu0 0.0
  %1049 = vmatpush2.msra.mxu0 0.0
  %1050 = vmatprep.subr.mxu0 0.0
  %1051 = vmatpush2.msra.mxu0 0.0
  %1052 = vmatprep.subr.mxu0 0.0
  %1053 = vmatpush2.msra.mxu0 0.0
  %1054 = vmatprep.subr.mxu0 0.0
  %1055 = vmatpush2.msra.mxu0 0.0
  %1056 = vmatprep.subr.mxu0 0.0
  %1057 = vmatpush2.msra.mxu0 0.0
  %1058 = vmatprep.subr.mxu0 0.0
  %1059 = vmatpush2.msra.mxu0 0.0
  %1060 = vmatprep.subr.mxu0 0.0
  %1061 = vmatpush2.msra.mxu0 0.0
  %1062 = vmatprep.subr.mxu0 0.0
  %1063 = vmatpush2.msra.mxu0 0.0
  %1064 = vmatprep.mubr.f32.mxu0 0.0
  %1065 = vmatmul.mubr.f32.gmra.mxu0 %v998
  %v1066 = vpop.f32.mrf.mxu0
  %v1067 = vadd.f32 0.0, %v1066
  %v1068 = vpop.f32.mrf.mxu0
  %1069 = vdwg.mxu0
  %v1070 = vadd.f32 %v175, %v1067
  %v1071 = vxor.u32 %v1070, 2147483648
  %v1072 = vmul.f32 %v1071, 1.442695
  %v1073 = vpow.pop %v1072
  %v1074 = vadd.f32 %v1073, 1.0
  %v1075 = vrcp.pop %v1074
  %v1076 = vmul.f32 1.0, %v1075
  %v1077 = vtanh.pop %v1070
  %v1078 = vmul.f32 %v1076, %v988
  %1080 = vrot.lane.b32.xlu0 %v1077, 32
  %v1081 = vpop.permute.xlu0 %1080
  %v1083 = vmul.f32 %v1076, %v1081
  %1085 = vrot.lane.b32.xlu0 %v1083, 32
  %v1086 = vpop.permute.xlu0 %1085
  %v1088 = vadd.f32 %v1078, %v1086
  %v1089 = vtanh.pop %v1088
  %1091 = vrot.lane.b32.xlu0 %v1089, 32
  %v1092 = vpop.permute.xlu0 %1091
  %v1094 = vmul.f32 %v1076, %v1092
  %1096 = vrot.lane.b32.xlu0 %v1094, 64
  %v1097 = vpop.permute.xlu0 %1096
  %v1098 = vsel %vm292, %v1097, 0
  %1100 = vmatprep.subr.mxu0 0.0
  %1101 = vmatpush1.msra.mxu0 0.0
  %1102 = vmatprep.subr.mxu0 0.0
  %1103 = vmatpush1.msra.mxu0 0.0
  %1104 = vmatprep.subr.mxu0 0.0
  %1105 = vmatpush1.msra.mxu0 0.0
  %1106 = vmatprep.subr.mxu0 0.0
  %1107 = vmatpush1.msra.mxu0 0.0
  %1108 = vmatprep.subr.mxu0 0.0
  %1109 = vmatpush1.msra.mxu0 0.0
  %1110 = vmatprep.subr.mxu0 0.0
  %1111 = vmatpush1.msra.mxu0 0.0
  %1112 = vmatprep.subr.mxu0 0.0
  %1113 = vmatpush1.msra.mxu0 0.0
  %1114 = vmatprep.subr.mxu0 0.0
  %1115 = vmatpush1.msra.mxu0 0.0
  %1116 = vmatprep.subr.mxu0 0.0
  %1117 = vmatpush1.msra.mxu0 0.0
  %1118 = vmatprep.subr.mxu0 0.0
  %1119 = vmatpush1.msra.mxu0 0.0
  %1120 = vmatprep.subr.mxu0 0.0
  %1121 = vmatpush1.msra.mxu0 0.0
  %1122 = vmatprep.subr.mxu0 0.0
  %1123 = vmatpush1.msra.mxu0 0.0
  %1124 = vmatprep.subr.mxu0 0.0
  %1125 = vmatpush1.msra.mxu0 %v26
  %1126 = vmatprep.subr.mxu0 0.0
  %1127 = vmatpush1.msra.mxu0 %v25
  %1128 = vmatprep.subr.mxu0 0.0
  %1129 = vmatpush1.msra.mxu0 %v24
  %1130 = vmatprep.subr.mxu0 0.0
  %1131 = vmatpush1.msra.mxu0 %v23
  %1132 = vmatprep.subr.mxu0 0.0
  %1133 = vmatpush2.msra.mxu0 0.0
  %1134 = vmatprep.subr.mxu0 0.0
  %1135 = vmatpush2.msra.mxu0 0.0
  %1136 = vmatprep.subr.mxu0 0.0
  %1137 = vmatpush2.msra.mxu0 0.0
  %1138 = vmatprep.subr.mxu0 0.0
  %1139 = vmatpush2.msra.mxu0 0.0
  %1140 = vmatprep.subr.mxu0 0.0
  %1141 = vmatpush2.msra.mxu0 0.0
  %1142 = vmatprep.subr.mxu0 0.0
  %1143 = vmatpush2.msra.mxu0 0.0
  %1144 = vmatprep.subr.mxu0 0.0
  %1145 = vmatpush2.msra.mxu0 0.0
  %1146 = vmatprep.subr.mxu0 0.0
  %1147 = vmatpush2.msra.mxu0 0.0
  %1148 = vmatprep.subr.mxu0 0.0
  %1149 = vmatpush2.msra.mxu0 0.0
  %1150 = vmatprep.subr.mxu0 0.0
  %1151 = vmatpush2.msra.mxu0 0.0
  %1152 = vmatprep.subr.mxu0 0.0
  %1153 = vmatpush2.msra.mxu0 0.0
  %1154 = vmatprep.subr.mxu0 0.0
  %1155 = vmatpush2.msra.mxu0 0.0
  %1156 = vmatprep.subr.mxu0 0.0
  %1157 = vmatpush2.msra.mxu0 0.0
  %1158 = vmatprep.subr.mxu0 0.0
  %1159 = vmatpush2.msra.mxu0 0.0
  %1160 = vmatprep.subr.mxu0 0.0
  %1161 = vmatpush2.msra.mxu0 0.0
  %1162 = vmatprep.subr.mxu0 0.0
  %1163 = vmatpush2.msra.mxu0 0.0
  %1164 = vmatprep.mubr.f32.mxu0 0.0
  %1165 = vmatmul.mubr.f32.gmra.mxu0 %v1098
  %v1166 = vpop.f32.mrf.mxu0
  %v1167 = vadd.f32 0.0, %v1166
  %v1168 = vpop.f32.mrf.mxu0
  %1169 = vdwg.mxu0
  %v1170 = vadd.f32 %v269, %v1167
  %v1171 = vxor.u32 %v1170, 2147483648
  %v1172 = vmul.f32 %v1171, 1.442695
  %v1173 = vpow.pop %v1172
  %v1174 = vadd.f32 %v1173, 1.0
  %v1175 = vrcp.pop %v1174
  %v1176 = vmul.f32 1.0, %v1175
  %v1177 = vtanh.pop %v1170
  %v1178 = vmul.f32 %v1176, %v1088
  %1180 = vrot.lane.b32.xlu0 %v1177, 32
  %v1181 = vpop.permute.xlu0 %1180
  %v1183 = vmul.f32 %v1176, %v1181
  %1185 = vrot.lane.b32.xlu0 %v1183, 32
  %v1186 = vpop.permute.xlu0 %1185
  %v1188 = vadd.f32 %v1178, %v1186
  %v1189 = vtanh.pop %v1188
  %1191 = vrot.lane.b32.xlu0 %v1189, 32
  %v1192 = vpop.permute.xlu0 %1191
  %v1194 = vmul.f32 %v1176, %v1192
  %1196 = vrot.lane.b32.xlu0 %v1194, 64
  %v1197 = vpop.permute.xlu0 %1196
  %v1198 = vsel %vm292, %v1197, 0
  %1200 = vmatprep.subr.mxu0 0.0
  %1201 = vmatpush1.msra.mxu0 0.0
  %1202 = vmatprep.subr.mxu0 0.0
  %1203 = vmatpush1.msra.mxu0 0.0
  %1204 = vmatprep.subr.mxu0 0.0
  %1205 = vmatpush1.msra.mxu0 0.0
  %1206 = vmatprep.subr.mxu0 0.0
  %1207 = vmatpush1.msra.mxu0 0.0
  %1208 = vmatprep.subr.mxu0 0.0
  %1209 = vmatpush1.msra.mxu0 0.0
  %1210 = vmatprep.subr.mxu0 0.0
  %1211 = vmatpush1.msra.mxu0 0.0
  %1212 = vmatprep.subr.mxu0 0.0
  %1213 = vmatpush1.msra.mxu0 0.0
  %1214 = vmatprep.subr.mxu0 0.0
  %1215 = vmatpush1.msra.mxu0 0.0
  %1216 = vmatprep.subr.mxu0 0.0
  %1217 = vmatpush1.msra.mxu0 0.0
  %1218 = vmatprep.subr.mxu0 0.0
  %1219 = vmatpush1.msra.mxu0 0.0
  %1220 = vmatprep.subr.mxu0 0.0
  %1221 = vmatpush1.msra.mxu0 0.0
  %1222 = vmatprep.subr.mxu0 0.0
  %1223 = vmatpush1.msra.mxu0 0.0
  %1224 = vmatprep.subr.mxu0 0.0
  %1225 = vmatpush1.msra.mxu0 %v26
  %1226 = vmatprep.subr.mxu0 0.0
  %1227 = vmatpush1.msra.mxu0 %v25
  %1228 = vmatprep.subr.mxu0 0.0
  %1229 = vmatpush1.msra.mxu0 %v24
  %1230 = vmatprep.subr.mxu0 0.0
  %1231 = vmatpush1.msra.mxu0 %v23
  %1232 = vmatprep.subr.mxu0 0.0
  %1233 = vmatpush2.msra.mxu0 0.0
  %1234 = vmatprep.subr.mxu0 0.0
  %1235 = vmatpush2.msra.mxu0 0.0
  %1236 = vmatprep.subr.mxu0 0.0
  %1237 = vmatpush2.msra.mxu0 0.0
  %1238 = vmatprep.subr.mxu0 0.0
  %1239 = vmatpush2.msra.mxu0 0.0
  %1240 = vmatprep.subr.mxu0 0.0
  %1241 = vmatpush2.msra.mxu0 0.0
  %1242 = vmatprep.subr.mxu0 0.0
  %1243 = vmatpush2.msra.mxu0 0.0
  %1244 = vmatprep.subr.mxu0 0.0
  %1245 = vmatpush2.msra.mxu0 0.0
  %1246 = vmatprep.subr.mxu0 0.0
  %1247 = vmatpush2.msra.mxu0 0.0
  %1248 = vmatprep.subr.mxu0 0.0
  %1249 = vmatpush2.msra.mxu0 0.0
  %1250 = vmatprep.subr.mxu0 0.0
  %1251 = vmatpush2.msra.mxu0 0.0
  %1252 = vmatprep.subr.mxu0 0.0
  %1253 = vmatpush2.msra.mxu0 0.0
  %1254 = vmatprep.subr.mxu0 0.0
  %1255 = vmatpush2.msra.mxu0 0.0
  %1256 = vmatprep.subr.mxu0 0.0
  %1257 = vmatpush2.msra.mxu0 0.0
  %1258 = vmatprep.subr.mxu0 0.0
  %1259 = vmatpush2.msra.mxu0 0.0
  %1260 = vmatprep.subr.mxu0 0.0
  %1261 = vmatpush2.msra.mxu0 0.0
  %1262 = vmatprep.subr.mxu0 0.0
  %1263 = vmatpush2.msra.mxu0 0.0
  %1264 = vmatprep.mubr.f32.mxu0 0.0
  %1265 = vmatmul.mubr.f32.gmra.mxu0 %v1198
  %v1266 = vpop.f32.mrf.mxu0
  %v1267 = vadd.f32 0.0, %v1266
  %v1268 = vpop.f32.mrf.mxu0
  %1269 = vdwg.mxu0
  %v1270 = vadd.f32 %v274, %v1267
  %v1271 = vxor.u32 %v1270, 2147483648
  %v1272 = vmul.f32 %v1271, 1.442695
  %v1273 = vpow.pop %v1272
  %v1274 = vadd.f32 %v1273, 1.0
  %v1275 = vrcp.pop %v1274
  %v1276 = vmul.f32 1.0, %v1275
  %v1277 = vtanh.pop %v1270
  %v1278 = vmul.f32 %v1276, %v1188
  %1280 = vrot.lane.b32.xlu0 %v1277, 32
  %v1281 = vpop.permute.xlu0 %1280
  %v1283 = vmul.f32 %v1276, %v1281
  %1285 = vrot.lane.b32.xlu0 %v1283, 32
  %v1286 = vpop.permute.xlu0 %1285
  %v1288 = vadd.f32 %v1278, %v1286
  %v1289 = vtanh.pop %v1288
  %1291 = vrot.lane.b32.xlu0 %v1289, 32
  %v1292 = vpop.permute.xlu0 %1291
  %v1294 = vmul.f32 %v1276, %v1292
  %1296 = vrot.lane.b32.xlu0 %v1294, 64
  %v1297 = vpop.permute.xlu0 %1296
  %v1298 = vsel %vm292, %v1297, 0
  %1300 = vmatprep.subr.mxu0 0.0
  %1301 = vmatpush1.msra.mxu0 0.0
  %1302 = vmatprep.subr.mxu0 0.0
  %1303 = vmatpush1.msra.mxu0 0.0
  %1304 = vmatprep.subr.mxu0 0.0
  %1305 = vmatpush1.msra.mxu0 0.0
  %1306 = vmatprep.subr.mxu0 0.0
  %1307 = vmatpush1.msra.mxu0 0.0
  %1308 = vmatprep.subr.mxu0 0.0
  %1309 = vmatpush1.msra.mxu0 0.0
  %1310 = vmatprep.subr.mxu0 0.0
  %1311 = vmatpush1.msra.mxu0 0.0
  %1312 = vmatprep.subr.mxu0 0.0
  %1313 = vmatpush1.msra.mxu0 0.0
  %1314 = vmatprep.subr.mxu0 0.0
  %1315 = vmatpush1.msra.mxu0 0.0
  %1316 = vmatprep.subr.mxu0 0.0
  %1317 = vmatpush1.msra.mxu0 0.0
  %1318 = vmatprep.subr.mxu0 0.0
  %1319 = vmatpush1.msra.mxu0 0.0
  %1320 = vmatprep.subr.mxu0 0.0
  %1321 = vmatpush1.msra.mxu0 0.0
  %1322 = vmatprep.subr.mxu0 0.0
  %1323 = vmatpush1.msra.mxu0 0.0
  %1324 = vmatprep.subr.mxu0 0.0
  %1325 = vmatpush1.msra.mxu0 %v26
  %1326 = vmatprep.subr.mxu0 0.0
  %1327 = vmatpush1.msra.mxu0 %v25
  %1328 = vmatprep.subr.mxu0 0.0
  %1329 = vmatpush1.msra.mxu0 %v24
  %1330 = vmatprep.subr.mxu0 0.0
  %1331 = vmatpush1.msra.mxu0 %v23
  %1332 = vmatprep.subr.mxu0 0.0
  %1333 = vmatpush2.msra.mxu0 0.0
  %1334 = vmatprep.subr.mxu0 0.0
  %1335 = vmatpush2.msra.mxu0 0.0
  %1336 = vmatprep.subr.mxu0 0.0
  %1337 = vmatpush2.msra.mxu0 0.0
  %1338 = vmatprep.subr.mxu0 0.0
  %1339 = vmatpush2.msra.mxu0 0.0
  %1340 = vmatprep.subr.mxu0 0.0
  %1341 = vmatpush2.msra.mxu0 0.0
  %1342 = vmatprep.subr.mxu0 0.0
  %1343 = vmatpush2.msra.mxu0 0.0
  %1344 = vmatprep.subr.mxu0 0.0
  %1345 = vmatpush2.msra.mxu0 0.0
  %1346 = vmatprep.subr.mxu0 0.0
  %1347 = vmatpush2.msra.mxu0 0.0
  %1348 = vmatprep.subr.mxu0 0.0
  %1349 = vmatpush2.msra.mxu0 0.0
  %1350 = vmatprep.subr.mxu0 0.0
  %1351 = vmatpush2.msra.mxu0 0.0
  %1352 = vmatprep.subr.mxu0 0.0
  %1353 = vmatpush2.msra.mxu0 0.0
  %1354 = vmatprep.subr.mxu0 0.0
  %1355 = vmatpush2.msra.mxu0 0.0
  %1356 = vmatprep.subr.mxu0 0.0
  %1357 = vmatpush2.msra.mxu0 0.0
  %1358 = vmatprep.subr.mxu0 0.0
  %1359 = vmatpush2.msra.mxu0 0.0
  %1360 = vmatprep.subr.mxu0 0.0
  %1361 = vmatpush2.msra.mxu0 0.0
  %1362 = vmatprep.subr.mxu0 0.0
  %1363 = vmatpush2.msra.mxu0 0.0
  %1364 = vmatprep.mubr.f32.mxu0 0.0
  %1365 = vmatmul.mubr.f32.gmra.mxu0 %v1298
  %v1366 = vpop.f32.mrf.mxu0
  %v1367 = vadd.f32 0.0, %v1366
  %v1368 = vpop.f32.mrf.mxu0
  %1369 = vdwg.mxu0
  %v1370 = vadd.f32 %v279, %v1367
  %v1371 = vxor.u32 %v1370, 2147483648
  %v1372 = vmul.f32 %v1371, 1.442695
  %v1373 = vpow.pop %v1372
  %v1374 = vadd.f32 %v1373, 1.0
  %v1375 = vrcp.pop %v1374
  %v1376 = vmul.f32 1.0, %v1375
  %v1377 = vtanh.pop %v1370
  %v1378 = vmul.f32 %v1376, %v1288
  %1380 = vrot.lane.b32.xlu0 %v1377, 32
  %v1381 = vpop.permute.xlu0 %1380
  %v1383 = vmul.f32 %v1376, %v1381
  %1385 = vrot.lane.b32.xlu0 %v1383, 32
  %v1386 = vpop.permute.xlu0 %1385
  %v1388 = vadd.f32 %v1378, %v1386
  %v1389 = vtanh.pop %v1388
  %1391 = vrot.lane.b32.xlu0 %v1389, 32
  %v1392 = vpop.permute.xlu0 %1391
  %v1394 = vmul.f32 %v1376, %v1392
  %1396 = vrot.lane.b32.xlu0 %v1394, 64
  %v1397 = vpop.permute.xlu0 %1396
  %v1398 = vsel %vm292, %v1397, 0
  %1400 = vmatprep.subr.mxu0 0.0
  %1401 = vmatpush1.msra.mxu0 0.0
  %1402 = vmatprep.subr.mxu0 0.0
  %1403 = vmatpush1.msra.mxu0 0.0
  %1404 = vmatprep.subr.mxu0 0.0
  %1405 = vmatpush1.msra.mxu0 0.0
  %1406 = vmatprep.subr.mxu0 0.0
  %1407 = vmatpush1.msra.mxu0 0.0
  %1408 = vmatprep.subr.mxu0 0.0
  %1409 = vmatpush1.msra.mxu0 0.0
  %1410 = vmatprep.subr.mxu0 0.0
  %1411 = vmatpush1.msra.mxu0 0.0
  %1412 = vmatprep.subr.mxu0 0.0
  %1413 = vmatpush1.msra.mxu0 0.0
  %1414 = vmatprep.subr.mxu0 0.0
  %1415 = vmatpush1.msra.mxu0 0.0
  %1416 = vmatprep.subr.mxu0 0.0
  %1417 = vmatpush1.msra.mxu0 0.0
  %1418 = vmatprep.subr.mxu0 0.0
  %1419 = vmatpush1.msra.mxu0 0.0
  %1420 = vmatprep.subr.mxu0 0.0
  %1421 = vmatpush1.msra.mxu0 0.0
  %1422 = vmatprep.subr.mxu0 0.0
  %1423 = vmatpush1.msra.mxu0 0.0
  %1424 = vmatprep.subr.mxu0 0.0
  %1425 = vmatpush1.msra.mxu0 %v26
  %1426 = vmatprep.subr.mxu0 0.0
  %1427 = vmatpush1.msra.mxu0 %v25
  %1428 = vmatprep.subr.mxu0 0.0
  %1429 = vmatpush1.msra.mxu0 %v24
  %1430 = vmatprep.subr.mxu0 0.0
  %1431 = vmatpush1.msra.mxu0 %v23
  %1432 = vmatprep.subr.mxu0 0.0
  %1433 = vmatpush2.msra.mxu0 0.0
  %1434 = vmatprep.subr.mxu0 0.0
  %1435 = vmatpush2.msra.mxu0 0.0
  %1436 = vmatprep.subr.mxu0 0.0
  %1437 = vmatpush2.msra.mxu0 0.0
  %1438 = vmatprep.subr.mxu0 0.0
  %1439 = vmatpush2.msra.mxu0 0.0
  %1440 = vmatprep.subr.mxu0 0.0
  %1441 = vmatpush2.msra.mxu0 0.0
  %1442 = vmatprep.subr.mxu0 0.0
  %1443 = vmatpush2.msra.mxu0 0.0
  %1444 = vmatprep.subr.mxu0 0.0
  %1445 = vmatpush2.msra.mxu0 0.0
  %1446 = vmatprep.subr.mxu0 0.0
  %1447 = vmatpush2.msra.mxu0 0.0
  %1448 = vmatprep.subr.mxu0 0.0
  %1449 = vmatpush2.msra.mxu0 0.0
  %1450 = vmatprep.subr.mxu0 0.0
  %1451 = vmatpush2.msra.mxu0 0.0
  %1452 = vmatprep.subr.mxu0 0.0
  %1453 = vmatpush2.msra.mxu0 0.0
  %1454 = vmatprep.subr.mxu0 0.0
  %1455 = vmatpush2.msra.mxu0 0.0
  %1456 = vmatprep.subr.mxu0 0.0
  %1457 = vmatpush2.msra.mxu0 0.0
  %1458 = vmatprep.subr.mxu0 0.0
  %1459 = vmatpush2.msra.mxu0 0.0
  %1460 = vmatprep.subr.mxu0 0.0
  %1461 = vmatpush2.msra.mxu0 0.0
  %1462 = vmatprep.subr.mxu0 0.0
  %1463 = vmatpush2.msra.mxu0 0.0
  %1464 = vmatprep.mubr.f32.mxu0 0.0
  %1465 = vmatmul.mubr.f32.gmra.mxu0 %v1398
  %v1466 = vpop.f32.mrf.mxu0
  %v1467 = vadd.f32 0.0, %v1466
  %v1468 = vpop.f32.mrf.mxu0
  %1469 = vdwg.mxu0
  %v1470 = vadd.f32 %v284, %v1467
  %v1471 = vxor.u32 %v1470, 2147483648
  %v1472 = vmul.f32 %v1471, 1.442695
  %v1473 = vpow.pop %v1472
  %v1474 = vadd.f32 %v1473, 1.0
  %v1475 = vrcp.pop %v1474
  %v1476 = vmul.f32 1.0, %v1475
  %v1477 = vtanh.pop %v1470
  %v1478 = vmul.f32 %v1476, %v1388
  %1480 = vrot.lane.b32.xlu0 %v1477, 32
  %v1481 = vpop.permute.xlu0 %1480
  %v1483 = vmul.f32 %v1476, %v1481
  %1485 = vrot.lane.b32.xlu0 %v1483, 32
  %v1486 = vpop.permute.xlu0 %1485
  %v1488 = vadd.f32 %v1478, %v1486
  %v1489 = vtanh.pop %v1488
  %1491 = vrot.lane.b32.xlu0 %v1489, 32
  %v1492 = vpop.permute.xlu0 %1491
  %v1494 = vmul.f32 %v1476, %v1492
  %1496 = vrot.lane.b32.xlu0 %v1494, 64
  %v1497 = vpop.permute.xlu0 %1496
  %v1498 = vsel %vm292, %v1497, 0
  %1500 = vmatprep.subr.mxu0 0.0
  %1501 = vmatpush1.msra.mxu0 0.0
  %1502 = vmatprep.subr.mxu0 0.0
  %1503 = vmatpush1.msra.mxu0 0.0
  %1504 = vmatprep.subr.mxu0 0.0
  %1505 = vmatpush1.msra.mxu0 0.0
  %1506 = vmatprep.subr.mxu0 0.0
  %1507 = vmatpush1.msra.mxu0 0.0
  %1508 = vmatprep.subr.mxu0 0.0
  %1509 = vmatpush1.msra.mxu0 0.0
  %1510 = vmatprep.subr.mxu0 0.0
  %1511 = vmatpush1.msra.mxu0 0.0
  %1512 = vmatprep.subr.mxu0 0.0
  %1513 = vmatpush1.msra.mxu0 0.0
  %1514 = vmatprep.subr.mxu0 0.0
  %1515 = vmatpush1.msra.mxu0 0.0
  %1516 = vmatprep.subr.mxu0 0.0
  %1517 = vmatpush1.msra.mxu0 0.0
  %1518 = vmatprep.subr.mxu0 0.0
  %1519 = vmatpush1.msra.mxu0 0.0
  %1520 = vmatprep.subr.mxu0 0.0
  %1521 = vmatpush1.msra.mxu0 0.0
  %1522 = vmatprep.subr.mxu0 0.0
  %1523 = vmatpush1.msra.mxu0 0.0
  %1524 = vmatprep.subr.mxu0 0.0
  %1525 = vmatpush1.msra.mxu0 %v26
  %1526 = vmatprep.subr.mxu0 0.0
  %1527 = vmatpush1.msra.mxu0 %v25
  %1528 = vmatprep.subr.mxu0 0.0
  %1529 = vmatpush1.msra.mxu0 %v24
  %1530 = vmatprep.subr.mxu0 0.0
  %1531 = vmatpush1.msra.mxu0 %v23
  %1532 = vmatprep.subr.mxu0 0.0
  %1533 = vmatpush2.msra.mxu0 0.0
  %1534 = vmatprep.subr.mxu0 0.0
  %1535 = vmatpush2.msra.mxu0 0.0
  %1536 = vmatprep.subr.mxu0 0.0
  %1537 = vmatpush2.msra.mxu0 0.0
  %1538 = vmatprep.subr.mxu0 0.0
  %1539 = vmatpush2.msra.mxu0 0.0
  %1540 = vmatprep.subr.mxu0 0.0
  %1541 = vmatpush2.msra.mxu0 0.0
  %1542 = vmatprep.subr.mxu0 0.0
  %1543 = vmatpush2.msra.mxu0 0.0
  %1544 = vmatprep.subr.mxu0 0.0
  %1545 = vmatpush2.msra.mxu0 0.0
  %1546 = vmatprep.subr.mxu0 0.0
  %1547 = vmatpush2.msra.mxu0 0.0
  %1548 = vmatprep.subr.mxu0 0.0
  %1549 = vmatpush2.msra.mxu0 0.0
  %1550 = vmatprep.subr.mxu0 0.0
  %1551 = vmatpush2.msra.mxu0 0.0
  %1552 = vmatprep.subr.mxu0 0.0
  %1553 = vmatpush2.msra.mxu0 0.0
  %1554 = vmatprep.subr.mxu0 0.0
  %1555 = vmatpush2.msra.mxu0 0.0
  %1556 = vmatprep.subr.mxu0 0.0
  %1557 = vmatpush2.msra.mxu0 0.0
  %1558 = vmatprep.subr.mxu0 0.0
  %1559 = vmatpush2.msra.mxu0 0.0
  %1560 = vmatprep.subr.mxu0 0.0
  %1561 = vmatpush2.msra.mxu0 0.0
  %1562 = vmatprep.subr.mxu0 0.0
  %1563 = vmatpush2.msra.mxu0 0.0
  %1564 = vmatprep.mubr.f32.mxu0 0.0
  %1565 = vmatmul.mubr.f32.gmra.mxu0 %v1498
  %v1566 = vpop.f32.mrf.mxu0
  %v1567 = vadd.f32 0.0, %v1566
  %v1568 = vpop.f32.mrf.mxu0
  %1569 = vdwg.mxu0
  %v1570 = vadd.f32 %v289, %v1567
  %v1571 = vxor.u32 %v1570, 2147483648
  %v1572 = vmul.f32 %v1571, 1.442695
  %v1573 = vpow.pop %v1572
  %v1574 = vadd.f32 %v1573, 1.0
  %v1575 = vrcp.pop %v1574
  %v1576 = vmul.f32 1.0, %v1575
  %v1577 = vtanh.pop %v1570
  %v1578 = vmul.f32 %v1576, %v1488
  %1580 = vrot.lane.b32.xlu0 %v1577, 32
  %v1581 = vpop.permute.xlu0 %1580
  %v1583 = vmul.f32 %v1576, %v1581
  %1585 = vrot.lane.b32.xlu0 %v1583, 32
  %v1586 = vpop.permute.xlu0 %1585
  %v1588 = vadd.f32 %v1578, %v1586
  %v1589 = vtanh.pop %v1588
  %1591 = vrot.lane.b32.xlu0 %v1589, 32
  %v1592 = vpop.permute.xlu0 %1591
  %v1594 = vmul.f32 %v1576, %v1592
  %v1595 = vmax.f32 %v1194, 0.0
  %v1596 = vmax.f32 %v1294, 0.0
  %v1597 = vmax.f32 %v1394, 0.0
  %v1598 = vmax.f32 %v1494, 0.0
  %v1599 = vmax.f32 %v1594, 0.0
  %v1600 = vlaneseq
  %v1601 = vshrl.u32 %v1600, 7
  %v1602 = vsub.s32 0, %v1601
  %v1603 = vrot.slane %v33, %v1602
  %1609 = vrot.lane.b32.xlu0 %v1595, 64
  %v1610 = vpop.permute.xlu0 %1609
  %1611 = vrot.lane.b32.xlu0 %v1596, 64
  %v1612 = vpop.permute.xlu0 %1611
  %1613 = vrot.lane.b32.xlu0 %v1597, 64
  %v1614 = vpop.permute.xlu0 %1613
  %1615 = vrot.lane.b32.xlu0 %v1598, 64
  %v1616 = vpop.permute.xlu0 %1615
  %1617 = vrot.lane.b32.xlu0 %v1599, 64
  %v1618 = vpop.permute.xlu0 %1617
  %v1619 = vsel %vm292, %v1610, 0
  %v1621 = vsel %vm292, %v1612, 0
  %v1623 = vsel %vm292, %v1614, 0
  %v1625 = vsel %vm292, %v1616, 0
  %v1627 = vsel %vm292, %v1618, 0
  %1629 = vmatprep.subr.mxu0 0.0
  %1630 = vmatpush1.msra.mxu0 0.0
  %1631 = vmatprep.subr.mxu0 0.0
  %1632 = vmatpush1.msra.mxu0 0.0
  %1633 = vmatprep.subr.mxu0 0.0
  %1634 = vmatpush1.msra.mxu0 0.0
  %1635 = vmatprep.subr.mxu0 0.0
  %1636 = vmatpush1.msra.mxu0 0.0
  %1637 = vmatprep.subr.mxu0 0.0
  %1638 = vmatpush1.msra.mxu0 0.0
  %1639 = vmatprep.subr.mxu0 0.0
  %1640 = vmatpush1.msra.mxu0 0.0
  %1641 = vmatprep.subr.mxu0 0.0
  %1642 = vmatpush1.msra.mxu0 0.0
  %1643 = vmatprep.subr.mxu0 0.0
  %1644 = vmatpush1.msra.mxu0 0.0
  %1645 = vmatprep.subr.mxu0 0.0
  %1646 = vmatpush1.msra.mxu0 0.0
  %1647 = vmatprep.subr.mxu0 0.0
  %1648 = vmatpush1.msra.mxu0 0.0
  %1649 = vmatprep.subr.mxu0 0.0
  %1650 = vmatpush1.msra.mxu0 0.0
  %1651 = vmatprep.subr.mxu0 0.0
  %1652 = vmatpush1.msra.mxu0 0.0
  %1653 = vmatprep.subr.mxu0 0.0
  %1654 = vmatpush1.msra.mxu0 %v32
  %1655 = vmatprep.subr.mxu0 0.0
  %1656 = vmatpush1.msra.mxu0 %v31
  %1657 = vmatprep.subr.mxu0 0.0
  %1658 = vmatpush1.msra.mxu0 %v30
  %1659 = vmatprep.subr.mxu0 0.0
  %1660 = vmatpush1.msra.mxu0 %v29
  %1661 = vmatprep.subr.mxu0 0.0
  %1662 = vmatpush2.msra.mxu0 0.0
  %1663 = vmatprep.subr.mxu0 0.0
  %1664 = vmatpush2.msra.mxu0 0.0
  %1665 = vmatprep.subr.mxu0 0.0
  %1666 = vmatpush2.msra.mxu0 0.0
  %1667 = vmatprep.subr.mxu0 0.0
  %1668 = vmatpush2.msra.mxu0 0.0
  %1669 = vmatprep.subr.mxu0 0.0
  %1670 = vmatpush2.msra.mxu0 0.0
  %1671 = vmatprep.subr.mxu0 0.0
  %1672 = vmatpush2.msra.mxu0 0.0
  %1673 = vmatprep.subr.mxu0 0.0
  %1674 = vmatpush2.msra.mxu0 0.0
  %1675 = vmatprep.subr.mxu0 0.0
  %1676 = vmatpush2.msra.mxu0 0.0
  %1677 = vmatprep.subr.mxu0 0.0
  %1678 = vmatpush2.msra.mxu0 0.0
  %1679 = vmatprep.subr.mxu0 0.0
  %1680 = vmatpush2.msra.mxu0 0.0
  %1681 = vmatprep.subr.mxu0 0.0
  %1682 = vmatpush2.msra.mxu0 0.0
  %1683 = vmatprep.subr.mxu0 0.0
  %1684 = vmatpush2.msra.mxu0 0.0
  %1685 = vmatprep.subr.mxu0 0.0
  %1686 = vmatpush2.msra.mxu0 0.0
  %1687 = vmatprep.subr.mxu0 0.0
  %1688 = vmatpush2.msra.mxu0 0.0
  %1689 = vmatprep.subr.mxu0 0.0
  %1690 = vmatpush2.msra.mxu0 0.0
  %1691 = vmatprep.subr.mxu0 0.0
  %1692 = vmatpush2.msra.mxu0 0.0
  %1693 = vmatprep.mubr.f32.mxu0 0.0
  %1694 = vmatmul.mubr.f32.gmra.mxu0 %v1619
  %v1695 = vpop.f32.mrf.mxu0
  %v1696 = vadd.f32 %v1603, %v1695
  %v1697 = vpop.f32.mrf.mxu0
  %1698 = vmatprep.mubr.f32.mxu0 0.0
  %1699 = vmatmul.mubr.f32.gmra.mxu0 %v1621
  %v1700 = vpop.f32.mrf.mxu0
  %v1701 = vadd.f32 %v1603, %v1700
  %v1702 = vpop.f32.mrf.mxu0
  %1703 = vmatprep.mubr.f32.mxu0 0.0
  %1704 = vmatmul.mubr.f32.gmra.mxu0 %v1623
  %v1705 = vpop.f32.mrf.mxu0
  %v1706 = vadd.f32 %v1603, %v1705
  %v1707 = vpop.f32.mrf.mxu0
  %1708 = vmatprep.mubr.f32.mxu0 0.0
  %1709 = vmatmul.mubr.f32.gmra.mxu0 %v1625
  %v1710 = vpop.f32.mrf.mxu0
  %v1711 = vadd.f32 %v1603, %v1710
  %v1712 = vpop.f32.mrf.mxu0
  %1713 = vmatprep.mubr.f32.mxu0 0.0
  %1714 = vmatmul.mubr.f32.gmra.mxu0 %v1627
  %v1715 = vpop.f32.mrf.mxu0
  %v1716 = vadd.f32 %v1603, %v1715
  %v1717 = vpop.f32.mrf.mxu0
  %1718 = vdwg.mxu0
  %1719 = vst [vmem:[%s4] sm:$0xff] %v1696
  %1720 = vst [vmem:[%s4 + $0x8] sm:$0xff] %v1701
  %1721 = vst [vmem:[%s4 + $0x10] sm:$0xff] %v1706
  %1722 = vst [vmem:[%s4 + $0x18] sm:$0xff] %v1711
  %1723 = vst [vmem:[%s4 + $0x20] sm:$0xff] %v1716
  // Predicated region
  $region18: #{maize_lstm_forward.1} parent=0 // pred_check
    _
  $region19: #{maize_lstm_forward.1} parent=0 // pred_check_branch
    %1725 = sbr.rel (0) target = $region21
  $region20: #{maize_lstm_forward.1} parent=0 // pred_region
    _
  $region21: #{maize_lstm_forward.1} parent=0 // pred_fallthru
    _
  // Predicated region
  $region22: #{maize_lstm_forward.1} parent=0 // pred_check
    _
  $region23: #{maize_lstm_forward.1} parent=0 // pred_check_branch
    %1727 = sbr.rel (0) target = $region25
  $region24: #{maize_lstm_forward.1} parent=0 // pred_region
    _
  $region25: #{maize_lstm_forward.1} parent=0 // pred_fallthru
    _

</llo_original>
